<compile_context>
chip_gen: v6e
topology: v6e:2x2x1
jax: 0.10.0
libtpu: 0.0.40
codegen_flags: <defaults>
</compile_context>

<pallas_src>
import jax
import jax.numpy as jnp
from jax.experimental import pallas as pl
from jax.experimental.pallas import tpu as pltpu

# ----------------------------- config ---------------------------------------
C_IN, H, W = 3, 16, 16
PATCH = 4
N_PATCHES = (H // PATCH) * (W // PATCH)        # 16
SEQ = N_PATCHES + 1                            # patches + CLS (CLS is LAST) = 17
HIDDEN = 32
HEADS = 4
HEAD_DIM = HIDDEN // HEADS
MLP = 64
NUM_CLASSES = 8
NUM_LABELS = 6
PATCH_DIM = C_IN * PATCH * PATCH               # 48
LN_EPS = 1e-5
VECW = 3 * HIDDEN                              # packed-vector row width (96)

CLIP_MEAN = (0.48145466, 0.4578275, 0.40821073)
CLIP_STD = (0.26862954, 0.26130258, 0.27577711)

# packed-vector row indices
(R_GPRE, R_BPRE, R_G1, R_B1, R_BQKV, R_BO,
 R_G2, R_B2, R_BM1, R_BM2, R_BC, R_WCE) = range(12)
N_VEC_ROWS = 12


def _ln(x, g, b):
    mu = jnp.mean(x, axis=-1, keepdims=True)
    var = jnp.mean((x - mu) ** 2, axis=-1, keepdims=True)
    return (x - mu) * jax.lax.rsqrt(var + LN_EPS) * g + b


# --------------------------- fused Pallas kernel -----------------------------
def clip_clf_fused_kernel(patches_ref, embed_ref, wpatch_ref, wqkv_ref, wo_ref,
                          w1_ref, w2_ref, wc_ref, vecs_ref, o_ref):
    def vec(row, width=HIDDEN):
        # one packed parameter row; static sublane slice + prefix lane slice
        return vecs_ref[row:row + 1, :width]

    # --- patch embed + CLS/pos embedding (all folds done in the wrapper) ---
    # patches_ref row 16 is zero, so row 16 of x becomes cls + pos_cls.
    x = jnp.dot(patches_ref[...], wpatch_ref[...],
                preferred_element_type=jnp.float32) + embed_ref[...]

    # --- CLIP pre_layrnorm ---
    x = _ln(x, vec(R_GPRE), vec(R_BPRE))

    # --- self-attention block ---
    h = _ln(x, vec(R_G1), vec(R_B1))
    qkv = (jnp.dot(h, wqkv_ref[...], preferred_element_type=jnp.float32)
           + vec(R_BQKV, 3 * HIDDEN))                      # q already scaled

    head_ctx = []
    for hd in range(HEADS):                                # static, unrolled
        lo = hd * HEAD_DIM
        qh = qkv[:, lo:lo + HEAD_DIM]
        kh = qkv[:, HIDDEN + lo:HIDDEN + lo + HEAD_DIM]
        vh = qkv[:, 2 * HIDDEN + lo:2 * HIDDEN + lo + HEAD_DIM]
        scores = jax.lax.dot_general(qh, kh, (((1,), (1,)), ((), ())),
                                     preferred_element_type=jnp.float32)  # (S,S)
        scores = scores - jnp.max(scores, axis=-1, keepdims=True)
        p = jnp.exp(scores)
        p = p * pl.reciprocal(jnp.sum(p, axis=-1, keepdims=True), approx=True)
        head_ctx.append(jnp.dot(p, vh, preferred_element_type=jnp.float32))

    ctx = jnp.concatenate(head_ctx, axis=-1)               # (S, HIDDEN), in vregs
    attn_out = (jnp.dot(ctx, wo_ref[...],
                        preferred_element_type=jnp.float32) + vec(R_BO))
    x = x + attn_out

    # --- MLP block (quick_gelu, as in CLIP) ---
    h2 = _ln(x, vec(R_G2), vec(R_B2))
    m = jnp.dot(h2, w1_ref[...], preferred_element_type=jnp.float32) + vec(R_BM1, MLP)
    m = m * jax.nn.sigmoid(1.702 * m)
    x = x + jnp.dot(m, w2_ref[...], preferred_element_type=jnp.float32) + vec(R_BM2)

    # --- mean-pool patch tokens (rows 0..15, 8-aligned; CLS is last) + head ---
    pooled = jnp.sum(x[0:N_PATCHES, :], axis=0, keepdims=True) * (1.0 / N_PATCHES)
    logits = (jnp.dot(pooled, wc_ref[...], preferred_element_type=jnp.float32)
              + vec(R_BC, NUM_CLASSES))                                        # (1, C)

    # cross_entropy on expanded logits == lse - (class_counts / N) . logits
    mx = jnp.max(logits, axis=-1, keepdims=True)
    lse = mx + jnp.log(jnp.sum(jnp.exp(logits - mx), axis=-1, keepdims=True))  # (1, 1)
    picked = jnp.sum(vec(R_WCE, NUM_CLASSES) * logits, axis=-1, keepdims=True)
    o_ref[...] = lse - picked


# ------------------------------- wrapper --------------------------------------
def clip_clf_loss(adv_image, labels, params):
    # TODO(synk): DiffCLIPImageProcessor resize/center-crop omitted (input already
    # at the model's native resolution); only the (folded) normalize is applied.
    # TODO(synk): for a PGD loop, batch B images and add a "parallel" grid axis
    # to use both v7x TensorCores and fill the MXU; kept single-image per spec.
    c, h, w = adv_image.shape
    patches = adv_image.reshape(c, h // PATCH, PATCH, w // PATCH, PATCH)
    patches = patches.transpose(1, 3, 0, 2, 4).reshape(N_PATCHES, PATCH_DIM)
    # extra zero row = CLS slot (contributes nothing through the patch matmul)
    patches17 = jnp.pad(patches, ((0, 1), (0, 0)))

    mean = jnp.broadcast_to(jnp.asarray(CLIP_MEAN, jnp.float32)[:, None, None],
                            (C_IN, PATCH, PATCH)).reshape(PATCH_DIM)
    std = jnp.broadcast_to(jnp.asarray(CLIP_STD, jnp.float32)[:, None, None],
                           (C_IN, PATCH, PATCH)).reshape(PATCH_DIM)

    # fold CLIP normalize into the patch-embedding weights (exact)
    wpatch = params["patch_w"] / std[:, None]                                   # (48, 32)
    bias_fold = params["patch_b"] - jnp.dot((mean / std)[None, :],
                                            params["patch_w"])                 # (1, 32)

    # embedding add: rows 0..15 -> pos[patch] + folded bias ; row 16 -> cls + pos[cls]
    embed_add = jnp.concatenate(
        [params["pos"][1:] + bias_fold,
         params["pos"][0:1] + params["cls"]], axis=0)                          # (17, 32)

    # fused QKV with 1/sqrt(head_dim) folded into the q weights/bias
    scale = HEAD_DIM ** -0.5
    wqkv = jnp.concatenate([params["wq"] * scale, params["wk"], params["wv"]],
                           axis=1)                                             # (32, 96)
    bqkv = jnp.concatenate([params["bq"] * scale, params["bk"], params["bv"]],
                           axis=1)                                             # (1, 96)

    # cross-entropy reduction weights: mean over labels of logits[label]
    counts = jnp.zeros((NUM_CLASSES,), jnp.float32).at[labels].add(1.0)
    wce = (counts / labels.shape[0])[None, :]                                  # (1, 8)

    # pack all small vectors into one (12, 96) array -> a single DMA
    def row(v):
        v = v.reshape(1, -1)
        return jnp.pad(v, ((0, 0), (0, VECW - v.shape[1])))
    vecs = jnp.concatenate([
        row(params["g_pre"]), row(params["b_pre"]),
        row(params["g1"]), row(params["b1"]),
        row(bqkv), row(params["bo"]),
        row(params["g2"]), row(params["b2"]),
        row(params["bm1"]), row(params["bm2"]),
        row(params["bc"]), row(wce)], axis=0)                                  # (12, 96)

    inputs = (patches17, embed_add, wpatch, wqkv, params["wo"],
              params["w1"], params["w2"], params["wc"], vecs)

    loss = pl.pallas_call(
        clip_clf_fused_kernel,
        out_shape=jax.ShapeDtypeStruct((1, 1), jnp.float32),
        in_specs=[pl.BlockSpec(memory_space=pltpu.MemorySpace.VMEM)
                  for _ in inputs],
        out_specs=pl.BlockSpec(memory_space=pltpu.MemorySpace.VMEM),
    )(*inputs)
    return loss[0, 0]


def init_params(key):
    ks = jax.random.split(key, 10)
    n = lambda k, s, sc=0.02: sc * jax.random.normal(k, s, jnp.float32)
    ones = lambda s: jnp.ones(s, jnp.float32)
    zeros = lambda s: jnp.zeros(s, jnp.float32)
    return dict(
        patch_w=n(ks[0], (PATCH_DIM, HIDDEN)), patch_b=zeros((1, HIDDEN)),
        cls=n(ks[1], (1, HIDDEN)), pos=n(ks[2], (SEQ, HIDDEN)),
        g_pre=ones((1, HIDDEN)), b_pre=zeros((1, HIDDEN)),
        g1=ones((1, HIDDEN)), b1=zeros((1, HIDDEN)),
        wq=n(ks[3], (HIDDEN, HIDDEN)), bq=zeros((1, HIDDEN)),
        wk=n(ks[4], (HIDDEN, HIDDEN)), bk=zeros((1, HIDDEN)),
        wv=n(ks[5], (HIDDEN, HIDDEN)), bv=zeros((1, HIDDEN)),
        wo=n(ks[6], (HIDDEN, HIDDEN)), bo=zeros((1, HIDDEN)),
        g2=ones((1, HIDDEN)), b2=zeros((1, HIDDEN)),
        w1=n(ks[7], (HIDDEN, MLP)), bm1=zeros((1, MLP)),
        w2=n(ks[8], (MLP, HIDDEN)), bm2=zeros((1, HIDDEN)),
        wc=n(ks[9], (HIDDEN, NUM_CLASSES)), bc=zeros((1, NUM_CLASSES)),
    )


if __name__ == "__main__":
    key = jax.random.PRNGKey(0)
    kp, ki, kl = jax.random.split(key, 3)
    params = init_params(kp)
    adv_image = jax.random.uniform(ki, (C_IN, H, W), jnp.float32)       # pixels in [0, 1]
    labels = jax.random.randint(kl, (NUM_LABELS,), 0, NUM_CLASSES, jnp.int32)

    loss = jax.jit(clip_clf_loss)(adv_image, labels, params)
    jax.block_until_ready(loss)
    print("KERNEL_OK")
</pallas_src>

<mosaic_0001>
module attributes {stable_mosaic.version = 11 : i64} {
  func.func @clip_clf_fused_kernel(%arg0: memref<17x48xf32, #tpu.memory_space<vmem>>, %arg1: memref<17x32xf32, #tpu.memory_space<vmem>>, %arg2: memref<48x32xf32, #tpu.memory_space<vmem>>, %arg3: memref<32x96xf32, #tpu.memory_space<vmem>>, %arg4: memref<32x32xf32, #tpu.memory_space<vmem>>, %arg5: memref<32x64xf32, #tpu.memory_space<vmem>>, %arg6: memref<64x32xf32, #tpu.memory_space<vmem>>, %arg7: memref<32x8xf32, #tpu.memory_space<vmem>>, %arg8: memref<12x96xf32, #tpu.memory_space<vmem>>, %arg9: memref<1x1xf32, #tpu.memory_space<vmem>>) attributes {dimension_semantics = [], scalar_prefetch = 0 : i64, scratch_operands = 0 : i64, tpu.core_type = #tpu.core_type<tc>} {
    %c0 = arith.constant 0 : index
    %c0_0 = arith.constant 0 : index
    %0 = vector.load %arg0[%c0, %c0_0] : memref<17x48xf32, #tpu.memory_space<vmem>>, vector<17x48xf32>
    %c0_1 = arith.constant 0 : index
    %c0_2 = arith.constant 0 : index
    %1 = vector.load %arg2[%c0_1, %c0_2] : memref<48x32xf32, #tpu.memory_space<vmem>>, vector<48x32xf32>
    %cst = arith.constant dense<0.000000e+00> : vector<17x32xf32>
    %2 = tpu.matmul %0, %1, %cst {dimension_numbers = #tpu.dot_dimension_numbers<[1], [0], [0], [1], [0, 0, 1, 1], [], []>} : vector<17x48xf32>, vector<48x32xf32>, vector<17x32xf32> -> vector<17x32xf32>
    %c0_3 = arith.constant 0 : index
    %c0_4 = arith.constant 0 : index
    %3 = vector.load %arg1[%c0_3, %c0_4] : memref<17x32xf32, #tpu.memory_space<vmem>>, vector<17x32xf32>
    %4 = arith.addf %2, %3 : vector<17x32xf32>
    %c0_5 = arith.constant 0 : index
    %c0_6 = arith.constant 0 : index
    %5 = vector.load %arg8[%c0_5, %c0_6] : memref<12x96xf32, #tpu.memory_space<vmem>>, vector<1x32xf32>
    %c1 = arith.constant 1 : index
    %c0_7 = arith.constant 0 : index
    %6 = vector.load %arg8[%c1, %c0_7] : memref<12x96xf32, #tpu.memory_space<vmem>>, vector<1x32xf32>
    %cst_8 = arith.constant dense<0.000000e+00> : vector<17xf32>
    %7 = vector.multi_reduction <add>, %4, %cst_8 [1] : vector<17x32xf32> to vector<17xf32>
    %8 = vector.shape_cast %7 : vector<17xf32> to vector<17x1xf32>
    %cst_9 = arith.constant 3.200000e+01 : f32
    %9 = vector.broadcast %cst_9 : f32 to vector<17x1xf32>
    %10 = arith.divf %8, %9 : vector<17x1xf32>
    %11 = vector.broadcast %10 : vector<17x1xf32> to vector<17x32xf32>
    %12 = arith.subf %4, %11 : vector<17x32xf32>
    %13 = arith.mulf %12, %12 : vector<17x32xf32>
    %cst_10 = arith.constant dense<0.000000e+00> : vector<17xf32>
    %14 = vector.multi_reduction <add>, %13, %cst_10 [1] : vector<17x32xf32> to vector<17xf32>
    %15 = vector.shape_cast %14 : vector<17xf32> to vector<17x1xf32>
    %cst_11 = arith.constant 3.200000e+01 : f32
    %16 = vector.broadcast %cst_11 : f32 to vector<17x1xf32>
    %17 = arith.divf %15, %16 : vector<17x1xf32>
    %18 = vector.broadcast %10 : vector<17x1xf32> to vector<17x32xf32>
    %19 = arith.subf %4, %18 : vector<17x32xf32>
    %cst_12 = arith.constant 9.99999974E-6 : f32
    %20 = vector.broadcast %cst_12 : f32 to vector<17x1xf32>
    %21 = arith.addf %17, %20 : vector<17x1xf32>
    %22 = math.rsqrt %21 : vector<17x1xf32>
    %23 = vector.broadcast %22 : vector<17x1xf32> to vector<17x32xf32>
    %24 = arith.mulf %19, %23 : vector<17x32xf32>
    %25 = vector.broadcast %5 : vector<1x32xf32> to vector<17x32xf32>
    %26 = arith.mulf %24, %25 : vector<17x32xf32>
    %27 = vector.broadcast %6 : vector<1x32xf32> to vector<17x32xf32>
    %28 = arith.addf %26, %27 : vector<17x32xf32>
    %c2 = arith.constant 2 : index
    %c0_13 = arith.constant 0 : index
    %29 = vector.load %arg8[%c2, %c0_13] : memref<12x96xf32, #tpu.memory_space<vmem>>, vector<1x32xf32>
    %c3 = arith.constant 3 : index
    %c0_14 = arith.constant 0 : index
    %30 = vector.load %arg8[%c3, %c0_14] : memref<12x96xf32, #tpu.memory_space<vmem>>, vector<1x32xf32>
    %cst_15 = arith.constant dense<0.000000e+00> : vector<17xf32>
    %31 = vector.multi_reduction <add>, %28, %cst_15 [1] : vector<17x32xf32> to vector<17xf32>
    %32 = vector.shape_cast %31 : vector<17xf32> to vector<17x1xf32>
    %cst_16 = arith.constant 3.200000e+01 : f32
    %33 = vector.broadcast %cst_16 : f32 to vector<17x1xf32>
    %34 = arith.divf %32, %33 : vector<17x1xf32>
    %35 = vector.broadcast %34 : vector<17x1xf32> to vector<17x32xf32>
    %36 = arith.subf %28, %35 : vector<17x32xf32>
    %37 = arith.mulf %36, %36 : vector<17x32xf32>
    %cst_17 = arith.constant dense<0.000000e+00> : vector<17xf32>
    %38 = vector.multi_reduction <add>, %37, %cst_17 [1] : vector<17x32xf32> to vector<17xf32>
    %39 = vector.shape_cast %38 : vector<17xf32> to vector<17x1xf32>
    %cst_18 = arith.constant 3.200000e+01 : f32
    %40 = vector.broadcast %cst_18 : f32 to vector<17x1xf32>
    %41 = arith.divf %39, %40 : vector<17x1xf32>
    %42 = vector.broadcast %34 : vector<17x1xf32> to vector<17x32xf32>
    %43 = arith.subf %28, %42 : vector<17x32xf32>
    %cst_19 = arith.constant 9.99999974E-6 : f32
    %44 = vector.broadcast %cst_19 : f32 to vector<17x1xf32>
    %45 = arith.addf %41, %44 : vector<17x1xf32>
    %46 = math.rsqrt %45 : vector<17x1xf32>
    %47 = vector.broadcast %46 : vector<17x1xf32> to vector<17x32xf32>
    %48 = arith.mulf %43, %47 : vector<17x32xf32>
    %49 = vector.broadcast %29 : vector<1x32xf32> to vector<17x32xf32>
    %50 = arith.mulf %48, %49 : vector<17x32xf32>
    %51 = vector.broadcast %30 : vector<1x32xf32> to vector<17x32xf32>
    %52 = arith.addf %50, %51 : vector<17x32xf32>
    %c0_20 = arith.constant 0 : index
    %c0_21 = arith.constant 0 : index
    %53 = vector.load %arg3[%c0_20, %c0_21] : memref<32x96xf32, #tpu.memory_space<vmem>>, vector<32x96xf32>
    %cst_22 = arith.constant dense<0.000000e+00> : vector<17x96xf32>
    %54 = tpu.matmul %52, %53, %cst_22 {dimension_numbers = #tpu.dot_dimension_numbers<[1], [0], [0], [1], [0, 0, 1, 1], [], []>} : vector<17x32xf32>, vector<32x96xf32>, vector<17x96xf32> -> vector<17x96xf32>
    %c4 = arith.constant 4 : index
    %c0_23 = arith.constant 0 : index
    %55 = vector.load %arg8[%c4, %c0_23] : memref<12x96xf32, #tpu.memory_space<vmem>>, vector<1x96xf32>
    %56 = vector.broadcast %55 : vector<1x96xf32> to vector<17x96xf32>
    %57 = arith.addf %54, %56 : vector<17x96xf32>
    %58 = vector.extract_strided_slice %57 {offsets = [0, 0], sizes = [17, 8], strides = [1, 1]} : vector<17x96xf32> to vector<17x8xf32>
    %59 = vector.extract_strided_slice %57 {offsets = [0, 32], sizes = [17, 8], strides = [1, 1]} : vector<17x96xf32> to vector<17x8xf32>
    %60 = vector.extract_strided_slice %57 {offsets = [0, 64], sizes = [17, 8], strides = [1, 1]} : vector<17x96xf32> to vector<17x8xf32>
    %cst_24 = arith.constant dense<0.000000e+00> : vector<17x17xf32>
    %61 = tpu.matmul %58, %59, %cst_24 {dimension_numbers = #tpu.dot_dimension_numbers<[1], [1], [0], [0], [0, 0, 1, 0], [], []>} : vector<17x8xf32>, vector<17x8xf32>, vector<17x17xf32> -> vector<17x17xf32>
    %cst_25 = arith.constant dense<0xFF800000> : vector<17xf32>
    %62 = vector.multi_reduction <maximumf>, %61, %cst_25 [1] : vector<17x17xf32> to vector<17xf32>
    %63 = vector.shape_cast %62 : vector<17xf32> to vector<17x1xf32>
    %64 = vector.broadcast %63 : vector<17x1xf32> to vector<17x17xf32>
    %65 = arith.subf %61, %64 : vector<17x17xf32>
    %66 = math.exp %65 : vector<17x17xf32>
    %cst_26 = arith.constant dense<0.000000e+00> : vector<17xf32>
    %67 = vector.multi_reduction <add>, %66, %cst_26 [1] : vector<17x17xf32> to vector<17xf32>
    %68 = vector.shape_cast %67 : vector<17xf32> to vector<17x1xf32>
    %69 = tpu.reciprocal %68 {approx = true} : vector<17x1xf32> -> vector<17x1xf32>
    %70 = vector.broadcast %69 : vector<17x1xf32> to vector<17x17xf32>
    %71 = arith.mulf %66, %70 : vector<17x17xf32>
    %cst_27 = arith.constant dense<0.000000e+00> : vector<17x8xf32>
    %72 = tpu.matmul %71, %60, %cst_27 {dimension_numbers = #tpu.dot_dimension_numbers<[1], [0], [0], [1], [0, 0, 1, 1], [], []>} : vector<17x17xf32>, vector<17x8xf32>, vector<17x8xf32> -> vector<17x8xf32>
    %73 = vector.extract_strided_slice %57 {offsets = [0, 8], sizes = [17, 8], strides = [1, 1]} : vector<17x96xf32> to vector<17x8xf32>
    %74 = vector.extract_strided_slice %57 {offsets = [0, 40], sizes = [17, 8], strides = [1, 1]} : vector<17x96xf32> to vector<17x8xf32>
    %75 = vector.extract_strided_slice %57 {offsets = [0, 72], sizes = [17, 8], strides = [1, 1]} : vector<17x96xf32> to vector<17x8xf32>
    %cst_28 = arith.constant dense<0.000000e+00> : vector<17x17xf32>
    %76 = tpu.matmul %73, %74, %cst_28 {dimension_numbers = #tpu.dot_dimension_numbers<[1], [1], [0], [0], [0, 0, 1, 0], [], []>} : vector<17x8xf32>, vector<17x8xf32>, vector<17x17xf32> -> vector<17x17xf32>
    %cst_29 = arith.constant dense<0xFF800000> : vector<17xf32>
    %77 = vector.multi_reduction <maximumf>, %76, %cst_29 [1] : vector<17x17xf32> to vector<17xf32>
    %78 = vector.shape_cast %77 : vector<17xf32> to vector<17x1xf32>
    %79 = vector.broadcast %78 : vector<17x1xf32> to vector<17x17xf32>
    %80 = arith.subf %76, %79 : vector<17x17xf32>
    %81 = math.exp %80 : vector<17x17xf32>
    %cst_30 = arith.constant dense<0.000000e+00> : vector<17xf32>
    %82 = vector.multi_reduction <add>, %81, %cst_30 [1] : vector<17x17xf32> to vector<17xf32>
    %83 = vector.shape_cast %82 : vector<17xf32> to vector<17x1xf32>
    %84 = tpu.reciprocal %83 {approx = true} : vector<17x1xf32> -> vector<17x1xf32>
    %85 = vector.broadcast %84 : vector<17x1xf32> to vector<17x17xf32>
    %86 = arith.mulf %81, %85 : vector<17x17xf32>
    %cst_31 = arith.constant dense<0.000000e+00> : vector<17x8xf32>
    %87 = tpu.matmul %86, %75, %cst_31 {dimension_numbers = #tpu.dot_dimension_numbers<[1], [0], [0], [1], [0, 0, 1, 1], [], []>} : vector<17x17xf32>, vector<17x8xf32>, vector<17x8xf32> -> vector<17x8xf32>
    %88 = vector.extract_strided_slice %57 {offsets = [0, 16], sizes = [17, 8], strides = [1, 1]} : vector<17x96xf32> to vector<17x8xf32>
    %89 = vector.extract_strided_slice %57 {offsets = [0, 48], sizes = [17, 8], strides = [1, 1]} : vector<17x96xf32> to vector<17x8xf32>
    %90 = vector.extract_strided_slice %57 {offsets = [0, 80], sizes = [17, 8], strides = [1, 1]} : vector<17x96xf32> to vector<17x8xf32>
    %cst_32 = arith.constant dense<0.000000e+00> : vector<17x17xf32>
    %91 = tpu.matmul %88, %89, %cst_32 {dimension_numbers = #tpu.dot_dimension_numbers<[1], [1], [0], [0], [0, 0, 1, 0], [], []>} : vector<17x8xf32>, vector<17x8xf32>, vector<17x17xf32> -> vector<17x17xf32>
    %cst_33 = arith.constant dense<0xFF800000> : vector<17xf32>
    %92 = vector.multi_reduction <maximumf>, %91, %cst_33 [1] : vector<17x17xf32> to vector<17xf32>
    %93 = vector.shape_cast %92 : vector<17xf32> to vector<17x1xf32>
    %94 = vector.broadcast %93 : vector<17x1xf32> to vector<17x17xf32>
    %95 = arith.subf %91, %94 : vector<17x17xf32>
    %96 = math.exp %95 : vector<17x17xf32>
    %cst_34 = arith.constant dense<0.000000e+00> : vector<17xf32>
    %97 = vector.multi_reduction <add>, %96, %cst_34 [1] : vector<17x17xf32> to vector<17xf32>
    %98 = vector.shape_cast %97 : vector<17xf32> to vector<17x1xf32>
    %99 = tpu.reciprocal %98 {approx = true} : vector<17x1xf32> -> vector<17x1xf32>
    %100 = vector.broadcast %99 : vector<17x1xf32> to vector<17x17xf32>
    %101 = arith.mulf %96, %100 : vector<17x17xf32>
    %cst_35 = arith.constant dense<0.000000e+00> : vector<17x8xf32>
    %102 = tpu.matmul %101, %90, %cst_35 {dimension_numbers = #tpu.dot_dimension_numbers<[1], [0], [0], [1], [0, 0, 1, 1], [], []>} : vector<17x17xf32>, vector<17x8xf32>, vector<17x8xf32> -> vector<17x8xf32>
    %103 = vector.extract_strided_slice %57 {offsets = [0, 24], sizes = [17, 8], strides = [1, 1]} : vector<17x96xf32> to vector<17x8xf32>
    %104 = vector.extract_strided_slice %57 {offsets = [0, 56], sizes = [17, 8], strides = [1, 1]} : vector<17x96xf32> to vector<17x8xf32>
    %105 = vector.extract_strided_slice %57 {offsets = [0, 88], sizes = [17, 8], strides = [1, 1]} : vector<17x96xf32> to vector<17x8xf32>
    %cst_36 = arith.constant dense<0.000000e+00> : vector<17x17xf32>
    %106 = tpu.matmul %103, %104, %cst_36 {dimension_numbers = #tpu.dot_dimension_numbers<[1], [1], [0], [0], [0, 0, 1, 0], [], []>} : vector<17x8xf32>, vector<17x8xf32>, vector<17x17xf32> -> vector<17x17xf32>
    %cst_37 = arith.constant dense<0xFF800000> : vector<17xf32>
    %107 = vector.multi_reduction <maximumf>, %106, %cst_37 [1] : vector<17x17xf32> to vector<17xf32>
    %108 = vector.shape_cast %107 : vector<17xf32> to vector<17x1xf32>
    %109 = vector.broadcast %108 : vector<17x1xf32> to vector<17x17xf32>
    %110 = arith.subf %106, %109 : vector<17x17xf32>
    %111 = math.exp %110 : vector<17x17xf32>
    %cst_38 = arith.constant dense<0.000000e+00> : vector<17xf32>
    %112 = vector.multi_reduction <add>, %111, %cst_38 [1] : vector<17x17xf32> to vector<17xf32>
    %113 = vector.shape_cast %112 : vector<17xf32> to vector<17x1xf32>
    %114 = tpu.reciprocal %113 {approx = true} : vector<17x1xf32> -> vector<17x1xf32>
    %115 = vector.broadcast %114 : vector<17x1xf32> to vector<17x17xf32>
    %116 = arith.mulf %111, %115 : vector<17x17xf32>
    %cst_39 = arith.constant dense<0.000000e+00> : vector<17x8xf32>
    %117 = tpu.matmul %116, %105, %cst_39 {dimension_numbers = #tpu.dot_dimension_numbers<[1], [0], [0], [1], [0, 0, 1, 1], [], []>} : vector<17x17xf32>, vector<17x8xf32>, vector<17x8xf32> -> vector<17x8xf32>
    %118 = tpu.concatenate %72, %87, %102, %117 in 1 : vector<17x8xf32>, vector<17x8xf32>, vector<17x8xf32>, vector<17x8xf32> -> vector<17x32xf32>
    %c0_40 = arith.constant 0 : index
    %c0_41 = arith.constant 0 : index
    %119 = vector.load %arg4[%c0_40, %c0_41] : memref<32x32xf32, #tpu.memory_space<vmem>>, vector<32x32xf32>
    %cst_42 = arith.constant dense<0.000000e+00> : vector<17x32xf32>
    %120 = tpu.matmul %118, %119, %cst_42 {dimension_numbers = #tpu.dot_dimension_numbers<[1], [0], [0], [1], [0, 0, 1, 1], [], []>} : vector<17x32xf32>, vector<32x32xf32>, vector<17x32xf32> -> vector<17x32xf32>
    %c5 = arith.constant 5 : index
    %c0_43 = arith.constant 0 : index
    %121 = vector.load %arg8[%c5, %c0_43] : memref<12x96xf32, #tpu.memory_space<vmem>>, vector<1x32xf32>
    %122 = vector.broadcast %121 : vector<1x32xf32> to vector<17x32xf32>
    %123 = arith.addf %120, %122 : vector<17x32xf32>
    %124 = arith.addf %28, %123 : vector<17x32xf32>
    %c6 = arith.constant 6 : index
    %c0_44 = arith.constant 0 : index
    %125 = vector.load %arg8[%c6, %c0_44] : memref<12x96xf32, #tpu.memory_space<vmem>>, vector<1x32xf32>
    %c7 = arith.constant 7 : index
    %c0_45 = arith.constant 0 : index
    %126 = vector.load %arg8[%c7, %c0_45] : memref<12x96xf32, #tpu.memory_space<vmem>>, vector<1x32xf32>
    %cst_46 = arith.constant dense<0.000000e+00> : vector<17xf32>
    %127 = vector.multi_reduction <add>, %124, %cst_46 [1] : vector<17x32xf32> to vector<17xf32>
    %128 = vector.shape_cast %127 : vector<17xf32> to vector<17x1xf32>
    %cst_47 = arith.constant 3.200000e+01 : f32
    %129 = vector.broadcast %cst_47 : f32 to vector<17x1xf32>
    %130 = arith.divf %128, %129 : vector<17x1xf32>
    %131 = vector.broadcast %130 : vector<17x1xf32> to vector<17x32xf32>
    %132 = arith.subf %124, %131 : vector<17x32xf32>
    %133 = arith.mulf %132, %132 : vector<17x32xf32>
    %cst_48 = arith.constant dense<0.000000e+00> : vector<17xf32>
    %134 = vector.multi_reduction <add>, %133, %cst_48 [1] : vector<17x32xf32> to vector<17xf32>
    %135 = vector.shape_cast %134 : vector<17xf32> to vector<17x1xf32>
    %cst_49 = arith.constant 3.200000e+01 : f32
    %136 = vector.broadcast %cst_49 : f32 to vector<17x1xf32>
    %137 = arith.divf %135, %136 : vector<17x1xf32>
    %138 = vector.broadcast %130 : vector<17x1xf32> to vector<17x32xf32>
    %139 = arith.subf %124, %138 : vector<17x32xf32>
    %cst_50 = arith.constant 9.99999974E-6 : f32
    %140 = vector.broadcast %cst_50 : f32 to vector<17x1xf32>
    %141 = arith.addf %137, %140 : vector<17x1xf32>
    %142 = math.rsqrt %141 : vector<17x1xf32>
    %143 = vector.broadcast %142 : vector<17x1xf32> to vector<17x32xf32>
    %144 = arith.mulf %139, %143 : vector<17x32xf32>
    %145 = vector.broadcast %125 : vector<1x32xf32> to vector<17x32xf32>
    %146 = arith.mulf %144, %145 : vector<17x32xf32>
    %147 = vector.broadcast %126 : vector<1x32xf32> to vector<17x32xf32>
    %148 = arith.addf %146, %147 : vector<17x32xf32>
    %c0_51 = arith.constant 0 : index
    %c0_52 = arith.constant 0 : index
    %149 = vector.load %arg5[%c0_51, %c0_52] : memref<32x64xf32, #tpu.memory_space<vmem>>, vector<32x64xf32>
    %cst_53 = arith.constant dense<0.000000e+00> : vector<17x64xf32>
    %150 = tpu.matmul %148, %149, %cst_53 {dimension_numbers = #tpu.dot_dimension_numbers<[1], [0], [0], [1], [0, 0, 1, 1], [], []>} : vector<17x32xf32>, vector<32x64xf32>, vector<17x64xf32> -> vector<17x64xf32>
    %c8 = arith.constant 8 : index
    %c0_54 = arith.constant 0 : index
    %151 = vector.load %arg8[%c8, %c0_54] : memref<12x96xf32, #tpu.memory_space<vmem>>, vector<1x64xf32>
    %152 = vector.broadcast %151 : vector<1x64xf32> to vector<17x64xf32>
    %153 = arith.addf %150, %152 : vector<17x64xf32>
    %cst_55 = arith.constant 1.702000e+00 : f32
    %154 = vector.broadcast %cst_55 : f32 to vector<17x64xf32>
    %155 = arith.mulf %154, %153 : vector<17x64xf32>
    %156 = arith.negf %155 : vector<17x64xf32>
    %157 = math.exp %156 : vector<17x64xf32>
    %cst_56 = arith.constant 1.000000e+00 : f32
    %158 = vector.broadcast %cst_56 : f32 to vector<17x64xf32>
    %159 = arith.addf %158, %157 : vector<17x64xf32>
    %160 = arith.divf %158, %159 : vector<17x64xf32>
    %161 = arith.mulf %153, %160 : vector<17x64xf32>
    %c0_57 = arith.constant 0 : index
    %c0_58 = arith.constant 0 : index
    %162 = vector.load %arg6[%c0_57, %c0_58] : memref<64x32xf32, #tpu.memory_space<vmem>>, vector<64x32xf32>
    %cst_59 = arith.constant dense<0.000000e+00> : vector<17x32xf32>
    %163 = tpu.matmul %161, %162, %cst_59 {dimension_numbers = #tpu.dot_dimension_numbers<[1], [0], [0], [1], [0, 0, 1, 1], [], []>} : vector<17x64xf32>, vector<64x32xf32>, vector<17x32xf32> -> vector<17x32xf32>
    %164 = arith.addf %124, %163 : vector<17x32xf32>
    %c9 = arith.constant 9 : index
    %c0_60 = arith.constant 0 : index
    %165 = vector.load %arg8[%c9, %c0_60] : memref<12x96xf32, #tpu.memory_space<vmem>>, vector<1x32xf32>
    %166 = vector.broadcast %165 : vector<1x32xf32> to vector<17x32xf32>
    %167 = arith.addf %164, %166 : vector<17x32xf32>
    %168 = vector.extract_strided_slice %167 {offsets = [0, 0], sizes = [16, 32], strides = [1, 1]} : vector<17x32xf32> to vector<16x32xf32>
    %cst_61 = arith.constant dense<0.000000e+00> : vector<32xf32>
    %169 = vector.multi_reduction <add>, %168, %cst_61 [0] : vector<16x32xf32> to vector<32xf32>
    %170 = vector.shape_cast %169 : vector<32xf32> to vector<1x32xf32>
    %cst_62 = arith.constant 6.250000e-02 : f32
    %171 = vector.broadcast %cst_62 : f32 to vector<1x32xf32>
    %172 = arith.mulf %170, %171 : vector<1x32xf32>
    %c0_63 = arith.constant 0 : index
    %c0_64 = arith.constant 0 : index
    %173 = vector.load %arg7[%c0_63, %c0_64] : memref<32x8xf32, #tpu.memory_space<vmem>>, vector<32x8xf32>
    %cst_65 = arith.constant dense<0.000000e+00> : vector<1x8xf32>
    %174 = tpu.matmul %172, %173, %cst_65 {dimension_numbers = #tpu.dot_dimension_numbers<[1], [0], [0], [1], [0, 0, 1, 1], [], []>} : vector<1x32xf32>, vector<32x8xf32>, vector<1x8xf32> -> vector<1x8xf32>
    %c10 = arith.constant 10 : index
    %c0_66 = arith.constant 0 : index
    %175 = vector.load %arg8[%c10, %c0_66] : memref<12x96xf32, #tpu.memory_space<vmem>>, vector<1x8xf32>
    %176 = arith.addf %174, %175 : vector<1x8xf32>
    %cst_67 = arith.constant dense<0xFF800000> : vector<1xf32>
    %177 = vector.multi_reduction <maximumf>, %176, %cst_67 [1] : vector<1x8xf32> to vector<1xf32>
    %178 = vector.shape_cast %177 : vector<1xf32> to vector<1x1xf32>
    %179 = vector.broadcast %178 : vector<1x1xf32> to vector<1x8xf32>
    %180 = arith.subf %176, %179 : vector<1x8xf32>
    %181 = math.exp %180 : vector<1x8xf32>
    %cst_68 = arith.constant dense<0.000000e+00> : vector<1xf32>
    %182 = vector.multi_reduction <add>, %181, %cst_68 [1] : vector<1x8xf32> to vector<1xf32>
    %183 = vector.shape_cast %182 : vector<1xf32> to vector<1x1xf32>
    %184 = math.log %183 : vector<1x1xf32>
    %185 = arith.addf %178, %184 : vector<1x1xf32>
    %c11 = arith.constant 11 : index
    %c0_69 = arith.constant 0 : index
    %186 = vector.load %arg8[%c11, %c0_69] : memref<12x96xf32, #tpu.memory_space<vmem>>, vector<1x8xf32>
    %187 = arith.mulf %186, %176 : vector<1x8xf32>
    %cst_70 = arith.constant dense<0.000000e+00> : vector<1xf32>
    %188 = vector.multi_reduction <add>, %187, %cst_70 [1] : vector<1x8xf32> to vector<1xf32>
    %189 = vector.shape_cast %188 : vector<1xf32> to vector<1x1xf32>
    %190 = arith.subf %185, %189 : vector<1x1xf32>
    %c0_71 = arith.constant 0 : index
    %c0_72 = arith.constant 0 : index
    %191 = vector.load %arg9[%c0_71, %c0_72] : memref<1x1xf32, #tpu.memory_space<vmem>>, vector<1x1xf32>
    tpu.vector_store %arg9[%c0_71, %c0_72], %190 {strides = array<i32>} : memref<1x1xf32, #tpu.memory_space<vmem>>, vector<1x1xf32>,
    return
  }
}

</mosaic_0001>

<llo_original>
// kernel: div.1
$region0: #{div.1}
  #allocation0 [shape = 's32[1]{0}', space=sflag, size = 0x4, scoped, tag = 'scoped memory for div.1']
  %s0 = inlined_call_operand.vmem [shape: f32[48], index: 0, kind: input, shape index: {}]
  %s1 = inlined_call_operand.vmem [shape: f32[48], index: 1, kind: input, shape index: {}]
  %s2 = inlined_call_operand.vmem [shape: f32[48], index: 2, kind: output, shape index: {}]
  %v3 = vld [vmem:[%s0] sm:$0x1]
  %v4 = vld [vmem:[%s1] sm:$0x1]
  %5 = xla_tuple %v3, %v4
  %6 = xla_tuple %5
  %v7 = vrcp.pop %v4
  %v8 = vmul.f32 %v3, %v7
  %9 = xla_tuple %v8
  %10 = vst [vmem:[%s2] sm:$0x1] %v8

// kernel: clip_clf_loss.1
$region0: #{clip_clf_loss.1}
  #allocation0 [shape = 'u32[]', space=smem, size = 0x4, offset = 0x4, fixed_abs, tag = 'smem constant byte address 0x4 - core index']
  #allocation1 [shape = 'u32[144,128]{1,0:T(1,128)}', space=vmem, size = 0x12000, scoped, tag = 'internal scratch']
  %s0 = inlined_call_operand.vmem [shape: f32[17,48], index: 0, kind: input, shape index: {}]
  %s1 = inlined_call_operand.vmem [shape: f32[17,32], index: 1, kind: input, shape index: {}]
  %s2 = inlined_call_operand.vmem [shape: f32[48,32], index: 2, kind: input, shape index: {}]
  %s3 = inlined_call_operand.vmem [shape: f32[32,96], index: 3, kind: input, shape index: {}]
  %s4 = inlined_call_operand.vmem [shape: f32[32,32], index: 4, kind: input, shape index: {}]
  %s5 = inlined_call_operand.vmem [shape: f32[32,64], index: 5, kind: input, shape index: {}]
  %s6 = inlined_call_operand.vmem [shape: f32[64,32], index: 6, kind: input, shape index: {}]
  %s7 = inlined_call_operand.vmem [shape: f32[32,8], index: 7, kind: input, shape index: {}]
  %s8 = inlined_call_operand.vmem [shape: f32[12,96], index: 8, kind: input, shape index: {}]
  %s9 = inlined_call_operand.hbm [shape: f32[1,1], index: 9, kind: output, shape index: {}]
  %s10 = sld [smem:[#allocation0]]
  $region46: #{clip_clf_loss.1} parent=0
    _
  %s12 = ssub.s32 1, %s10
  %s13 = scalar_select 0, %s12, %s10
  $region1: #{clip_clf_loss.1} parent=0
    #allocation2 [shape = 'u8[512]{0}', space=vmem, size = 0x400, scoped, tag = 'output window, operand 0, single buffered']
    #allocation3 [shape = 's32[1]{0}', space=sflag, size = 0x4, scoped, tag = 'scoped memory for clip_clf_loss.1']
    %14 = vsyncpa [#allocation3], 0
    // Predicated region
    $region2: #{clip_clf_loss.1} parent=1 // pred_check
      _
    $region3: #{clip_clf_loss.1} parent=1 // pred_check_branch
      %16 = sbr.rel (0) target = $region5
    $region4: #{clip_clf_loss.1} parent=1 // pred_region
      _
    $region5: #{clip_clf_loss.1} parent=1 // pred_fallthru
      _
    // Predicated region
    $region6: #{clip_clf_loss.1} parent=1 // pred_check
      _
    $region7: #{clip_clf_loss.1} parent=1 // pred_check_branch
      %18 = sbr.rel (0) target = $region9
    $region8: #{clip_clf_loss.1} parent=1 // pred_region
      _
    $region9: #{clip_clf_loss.1} parent=1 // pred_fallthru
      _
    // Predicated region
    $region10: #{clip_clf_loss.1} parent=1 // pred_check
      _
    $region11: #{clip_clf_loss.1} parent=1 // pred_check_branch
      %20 = sbr.rel (0) target = $region13
    $region12: #{clip_clf_loss.1} parent=1 // pred_region
      _
    $region13: #{clip_clf_loss.1} parent=1 // pred_fallthru
      _
    // Predicated region
    $region14: #{clip_clf_loss.1} parent=1 // pred_check
      _
    $region15: #{clip_clf_loss.1} parent=1 // pred_check_branch
      %22 = sbr.rel (0) target = $region17
    $region16: #{clip_clf_loss.1} parent=1 // pred_region
      _
    $region17: #{clip_clf_loss.1} parent=1 // pred_fallthru
      _
    // Predicated region
    $region18: #{clip_clf_loss.1} parent=1 // pred_check
      _
    $region19: #{clip_clf_loss.1} parent=1 // pred_check_branch
      %24 = sbr.rel (0) target = $region21
    $region20: #{clip_clf_loss.1} parent=1 // pred_region
      _
    $region21: #{clip_clf_loss.1} parent=1 // pred_fallthru
      _
    // Predicated region
    $region22: #{clip_clf_loss.1} parent=1 // pred_check
      _
    $region23: #{clip_clf_loss.1} parent=1 // pred_check_branch
      %26 = sbr.rel (0) target = $region25
    $region24: #{clip_clf_loss.1} parent=1 // pred_region
      _
    $region25: #{clip_clf_loss.1} parent=1 // pred_fallthru
      _
    // Predicated region
    $region26: #{clip_clf_loss.1} parent=1 // pred_check
      _
    $region27: #{clip_clf_loss.1} parent=1 // pred_check_branch
      %28 = sbr.rel (0) target = $region29
    $region28: #{clip_clf_loss.1} parent=1 // pred_region
      _
    $region29: #{clip_clf_loss.1} parent=1 // pred_fallthru
      _
    // Predicated region
    $region30: #{clip_clf_loss.1} parent=1 // pred_check
      _
    $region31: #{clip_clf_loss.1} parent=1 // pred_check_branch
      %30 = sbr.rel (0) target = $region33
    $region32: #{clip_clf_loss.1} parent=1 // pred_region
      _
    $region33: #{clip_clf_loss.1} parent=1 // pred_fallthru
      _
    // Predicated region
    $region34: #{clip_clf_loss.1} parent=1 // pred_check
      _
    $region35: #{clip_clf_loss.1} parent=1 // pred_check_branch
      %32 = sbr.rel (0) target = $region37
    $region36: #{clip_clf_loss.1} parent=1 // pred_region
      _
    $region37: #{clip_clf_loss.1} parent=1 // pred_fallthru
      _
    %v33 = vld [vmem:[%s0] sm:$0xff]
    %v34 = vld [vmem:[%s0 + $0x8] sm:$0xff]
    %v35 = vld [vmem:[%s0 + $0x10] sm:$0x1]
    %v36 = vld [vmem:[%s2] sm:$0xff]
    %v37 = vld [vmem:[%s2 + $0x8] sm:$0xff]
    %v38 = vld [vmem:[%s2 + $0x10] sm:$0xff]
    %v39 = vld [vmem:[%s2 + $0x18] sm:$0xff]
    %v40 = vld [vmem:[%s2 + $0x20] sm:$0xff]
    %v41 = vld [vmem:[%s2 + $0x28] sm:$0xff]
    %v42 = vld [vmem:[%s1] sm:$0xff]
    %v43 = vld [vmem:[%s1 + $0x8] sm:$0xff]
    %v44 = vld [vmem:[%s1 + $0x10] sm:$0x1]
    %vm45 = vcmask 392192
    %v47 = vsel %vm45, %v33, 0
    %v50 = vsel %vm45, %v34, 0
    %v53 = vsel %vm45, %v35, 0
    %55 = vmatprep.subr.mxu0 0.0
    %56 = vmatpush1.msra.mxu0 0.0
    %57 = vmatprep.subr.mxu0 0.0
    %58 = vmatpush1.msra.mxu0 0.0
    %59 = vmatprep.subr.mxu0 0.0
    %60 = vmatpush1.msra.mxu0 0.0
    %61 = vmatprep.subr.mxu0 0.0
    %62 = vmatpush1.msra.mxu0 0.0
    %63 = vmatprep.subr.mxu0 0.0
    %64 = vmatpush1.msra.mxu0 0.0
    %65 = vmatprep.subr.mxu0 0.0
    %66 = vmatpush1.msra.mxu0 0.0
    %67 = vmatprep.subr.mxu0 0.0
    %68 = vmatpush1.msra.mxu0 0.0
    %69 = vmatprep.subr.mxu0 0.0
    %70 = vmatpush1.msra.mxu0 0.0
    %71 = vmatprep.subr.mxu0 0.0
    %72 = vmatpush1.msra.mxu0 0.0
    %73 = vmatprep.subr.mxu0 0.0
    %74 = vmatpush1.msra.mxu0 0.0
    %75 = vmatprep.subr.mxu0 0.0
    %76 = vmatpush1.msra.mxu0 %v41
    %77 = vmatprep.subr.mxu0 0.0
    %78 = vmatpush1.msra.mxu0 %v40
    %79 = vmatprep.subr.mxu0 0.0
    %80 = vmatpush1.msra.mxu0 %v39
    %81 = vmatprep.subr.mxu0 0.0
    %82 = vmatpush1.msra.mxu0 %v38
    %83 = vmatprep.subr.mxu0 0.0
    %84 = vmatpush1.msra.mxu0 %v37
    %85 = vmatprep.subr.mxu0 0.0
    %86 = vmatpush1.msra.mxu0 %v36
    %87 = vmatprep.subr.mxu0 0.0
    %88 = vmatpush2.msra.mxu0 0.0
    %89 = vmatprep.subr.mxu0 0.0
    %90 = vmatpush2.msra.mxu0 0.0
    %91 = vmatprep.subr.mxu0 0.0
    %92 = vmatpush2.msra.mxu0 0.0
    %93 = vmatprep.subr.mxu0 0.0
    %94 = vmatpush2.msra.mxu0 0.0
    %95 = vmatprep.subr.mxu0 0.0
    %96 = vmatpush2.msra.mxu0 0.0
    %97 = vmatprep.subr.mxu0 0.0
    %98 = vmatpush2.msra.mxu0 0.0
    %99 = vmatprep.subr.mxu0 0.0
    %100 = vmatpush2.msra.mxu0 0.0
    %101 = vmatprep.subr.mxu0 0.0
    %102 = vmatpush2.msra.mxu0 0.0
    %103 = vmatprep.subr.mxu0 0.0
    %104 = vmatpush2.msra.mxu0 0.0
    %105 = vmatprep.subr.mxu0 0.0
    %106 = vmatpush2.msra.mxu0 0.0
    %107 = vmatprep.subr.mxu0 0.0
    %108 = vmatpush2.msra.mxu0 0.0
    %109 = vmatprep.subr.mxu0 0.0
    %110 = vmatpush2.msra.mxu0 0.0
    %111 = vmatprep.subr.mxu0 0.0
    %112 = vmatpush2.msra.mxu0 0.0
    %113 = vmatprep.subr.mxu0 0.0
    %114 = vmatpush2.msra.mxu0 0.0
    %115 = vmatprep.subr.mxu0 0.0
    %116 = vmatpush2.msra.mxu0 0.0
    %117 = vmatprep.subr.mxu0 0.0
    %118 = vmatpush2.msra.mxu0 0.0
    %119 = vmatprep.mubr.f32.mxu0 0.0
    %120 = vmatmul.mubr.f32.gmra.mxu0 %v47
    %v121 = vpop.f32.mrf.mxu0
    %v122 = vadd.f32 %v42, %v121
    %v123 = vpop.f32.mrf.mxu0
    %124 = vmatprep.mubr.f32.mxu0 0.0
    %125 = vmatmul.mubr.f32.gmra.mxu0 %v50
    %v126 = vpop.f32.mrf.mxu0
    %v127 = vadd.f32 %v43, %v126
    %v128 = vpop.f32.mrf.mxu0
    %129 = vmatprep.mubr.f32.mxu0 0.0
    %130 = vmatmul.mubr.f32.gmra.mxu0 %v53
    %v131 = vpop.f32.mrf.mxu0
    %v132 = vadd.f32 %v44, %v131
    %v133 = vpop.f32.mrf.mxu0
    %134 = vdwg.mxu0
    %v135 = vld [vmem:[%s8] sm:$0x1]
    %v136 = vld [vmem:[%s8 + $0x1] sm:$0x1]
    %vm137 = vcmask 261120
    %v138 = vsel %vm137, %v122, 0.0
    %139 = vadd.xlane.f32.xlu0 %v138
    %v140 = vpop.xlane.xlu0 %139
    %v141 = vsel %vm137, %v127, 0.0
    %142 = vadd.xlane.f32.xlu0 %v141
    %v143 = vpop.xlane.xlu0 %142
    %vm144 = vcmask 253952
    %v145 = vsel %vm144, %v132, 0.0
    %146 = vadd.xlane.f32.xlu0 %v145
    %v147 = vpop.xlane.xlu0 %146
    %v148 = vrcp.pop 32.0
    %v149 = vmul.f32 %v140, %v148
    %v150 = vmul.f32 %v143, %v148
    %v151 = vmul.f32 %v147, %v148
    %v152 = vsub.f32 %v122, %v149
    %v153 = vsub.f32 %v127, %v150
    %v154 = vsub.f32 %v132, %v151
    %v155 = vmul.f32 %v152, %v152
    %v156 = vmul.f32 %v153, %v153
    %v157 = vmul.f32 %v154, %v154
    %v158 = vsel %vm137, %v155, 0.0
    %159 = vadd.xlane.f32.xlu0 %v158
    %v160 = vpop.xlane.xlu0 %159
    %v161 = vsel %vm137, %v156, 0.0
    %162 = vadd.xlane.f32.xlu0 %v161
    %v163 = vpop.xlane.xlu0 %162
    %v164 = vsel %vm144, %v157, 0.0
    %165 = vadd.xlane.f32.xlu0 %v164
    %v166 = vpop.xlane.xlu0 %165
    %v167 = vmul.f32 %v160, %v148
    %v168 = vmul.f32 %v163, %v148
    %v169 = vmul.f32 %v166, %v148
    %v170 = vadd.f32 %v167, 1e-05
    %v171 = vadd.f32 %v168, 1e-05
    %v172 = vadd.f32 %v169, 1e-05
    %v173 = vrsqrt.pop %v170
    %v174 = vrsqrt.pop %v171
    %v175 = vrsqrt.pop %v172
    %v176 = vmul.f32 %v152, %v173
    %v177 = vmul.f32 %v153, %v174
    %v178 = vmul.f32 %v154, %v175
    %v179 = vlaneseq
    %v180 = vshrl.u32 %v179, 7
    %v181 = vsub.s32 0, %v180
    %v182 = vrot.slane %v135, %v181
    %v183 = vmul.f32 %v176, %v182
    %v184 = vmul.f32 %v177, %v182
    %v185 = vmul.f32 %v178, %v182
    %v186 = vlaneseq
    %v187 = vshrl.u32 %v186, 7
    %v188 = vsub.s32 0, %v187
    %v189 = vrot.slane %v136, %v188
    %v190 = vadd.f32 %v183, %v189
    %v191 = vadd.f32 %v184, %v189
    %v192 = vadd.f32 %v185, %v189
    %v193 = vld [vmem:[%s8 + $0x2] sm:$0x1]
    %v194 = vld [vmem:[%s8 + $0x3] sm:$0x1]
    %v195 = vsel %vm137, %v190, 0.0
    %196 = vadd.xlane.f32.xlu0 %v195
    %v197 = vpop.xlane.xlu0 %196
    %v198 = vsel %vm137, %v191, 0.0
    %199 = vadd.xlane.f32.xlu0 %v198
    %v200 = vpop.xlane.xlu0 %199
    %v201 = vsel %vm144, %v192, 0.0
    %202 = vadd.xlane.f32.xlu0 %v201
    %v203 = vpop.xlane.xlu0 %202
    %v204 = vmul.f32 %v197, %v148
    %v205 = vmul.f32 %v200, %v148
    %v206 = vmul.f32 %v203, %v148
    %v207 = vsub.f32 %v190, %v204
    %v208 = vsub.f32 %v191, %v205
    %v209 = vsub.f32 %v192, %v206
    %v210 = vmul.f32 %v207, %v207
    %v211 = vmul.f32 %v208, %v208
    %v212 = vmul.f32 %v209, %v209
    %v213 = vsel %vm137, %v210, 0.0
    %214 = vadd.xlane.f32.xlu0 %v213
    %v215 = vpop.xlane.xlu0 %214
    %v216 = vsel %vm137, %v211, 0.0
    %217 = vadd.xlane.f32.xlu0 %v216
    %v218 = vpop.xlane.xlu0 %217
    %v219 = vsel %vm144, %v212, 0.0
    %220 = vadd.xlane.f32.xlu0 %v219
    %v221 = vpop.xlane.xlu0 %220
    %v222 = vmul.f32 %v215, %v148
    %v223 = vmul.f32 %v218, %v148
    %v224 = vmul.f32 %v221, %v148
    %v225 = vadd.f32 %v222, 1e-05
    %v226 = vadd.f32 %v223, 1e-05
    %v227 = vadd.f32 %v224, 1e-05
    %v228 = vrsqrt.pop %v225
    %v229 = vrsqrt.pop %v226
    %v230 = vrsqrt.pop %v227
    %v231 = vmul.f32 %v207, %v228
    %v232 = vmul.f32 %v208, %v229
    %v233 = vmul.f32 %v209, %v230
    %v234 = vlaneseq
    %v235 = vshrl.u32 %v234, 7
    %v236 = vsub.s32 0, %v235
    %v237 = vrot.slane %v193, %v236
    %v238 = vmul.f32 %v231, %v237
    %v239 = vmul.f32 %v232, %v237
    %v240 = vmul.f32 %v233, %v237
    %v241 = vlaneseq
    %v242 = vshrl.u32 %v241, 7
    %v243 = vsub.s32 0, %v242
    %v244 = vrot.slane %v194, %v243
    %v245 = vadd.f32 %v238, %v244
    %v246 = vadd.f32 %v239, %v244
    %v247 = vadd.f32 %v240, %v244
    %v248 = vld [vmem:[%s3] sm:$0xff]
    %v249 = vld [vmem:[%s3 + $0x8] sm:$0xff]
    %v250 = vld [vmem:[%s3 + $0x10] sm:$0xff]
    %v251 = vld [vmem:[%s3 + $0x18] sm:$0xff]
    %v252 = vld [vmem:[%s8 + $0x4] sm:$0x1]
    %v253 = vlaneseq
    %v254 = vshrl.u32 %v253, 7
    %v255 = vsub.s32 0, %v254
    %v256 = vrot.slane %v252, %v255
    %v258 = vsel %vm137, %v245, 0
    %v261 = vsel %vm137, %v246, 0
    %v264 = vsel %vm137, %v247, 0
    %266 = vmatprep.subr.mxu0 0.0
    %267 = vmatpush1.msra.mxu0 0.0
    %268 = vmatprep.subr.mxu0 0.0
    %269 = vmatpush1.msra.mxu0 0.0
    %270 = vmatprep.subr.mxu0 0.0
    %271 = vmatpush1.msra.mxu0 0.0
    %272 = vmatprep.subr.mxu0 0.0
    %273 = vmatpush1.msra.mxu0 0.0
    %274 = vmatprep.subr.mxu0 0.0
    %275 = vmatpush1.msra.mxu0 0.0
    %276 = vmatprep.subr.mxu0 0.0
    %277 = vmatpush1.msra.mxu0 0.0
    %278 = vmatprep.subr.mxu0 0.0
    %279 = vmatpush1.msra.mxu0 0.0
    %280 = vmatprep.subr.mxu0 0.0
    %281 = vmatpush1.msra.mxu0 0.0
    %282 = vmatprep.subr.mxu0 0.0
    %283 = vmatpush1.msra.mxu0 0.0
    %284 = vmatprep.subr.mxu0 0.0
    %285 = vmatpush1.msra.mxu0 0.0
    %286 = vmatprep.subr.mxu0 0.0
    %287 = vmatpush1.msra.mxu0 0.0
    %288 = vmatprep.subr.mxu0 0.0
    %289 = vmatpush1.msra.mxu0 0.0
    %290 = vmatprep.subr.mxu0 0.0
    %291 = vmatpush1.msra.mxu0 %v251
    %292 = vmatprep.subr.mxu0 0.0
    %293 = vmatpush1.msra.mxu0 %v250
    %294 = vmatprep.subr.mxu0 0.0
    %295 = vmatpush1.msra.mxu0 %v249
    %296 = vmatprep.subr.mxu0 0.0
    %297 = vmatpush1.msra.mxu0 %v248
    %298 = vmatprep.subr.mxu0 0.0
    %299 = vmatpush2.msra.mxu0 0.0
    %300 = vmatprep.subr.mxu0 0.0
    %301 = vmatpush2.msra.mxu0 0.0
    %302 = vmatprep.subr.mxu0 0.0
    %303 = vmatpush2.msra.mxu0 0.0
    %304 = vmatprep.subr.mxu0 0.0
    %305 = vmatpush2.msra.mxu0 0.0
    %306 = vmatprep.subr.mxu0 0.0
    %307 = vmatpush2.msra.mxu0 0.0
    %308 = vmatprep.subr.mxu0 0.0
    %309 = vmatpush2.msra.mxu0 0.0
    %310 = vmatprep.subr.mxu0 0.0
    %311 = vmatpush2.msra.mxu0 0.0
    %312 = vmatprep.subr.mxu0 0.0
    %313 = vmatpush2.msra.mxu0 0.0
    %314 = vmatprep.subr.mxu0 0.0
    %315 = vmatpush2.msra.mxu0 0.0
    %316 = vmatprep.subr.mxu0 0.0
    %317 = vmatpush2.msra.mxu0 0.0
    %318 = vmatprep.subr.mxu0 0.0
    %319 = vmatpush2.msra.mxu0 0.0
    %320 = vmatprep.subr.mxu0 0.0
    %321 = vmatpush2.msra.mxu0 0.0
    %322 = vmatprep.subr.mxu0 0.0
    %323 = vmatpush2.msra.mxu0 0.0
    %324 = vmatprep.subr.mxu0 0.0
    %325 = vmatpush2.msra.mxu0 0.0
    %326 = vmatprep.subr.mxu0 0.0
    %327 = vmatpush2.msra.mxu0 0.0
    %328 = vmatprep.subr.mxu0 0.0
    %329 = vmatpush2.msra.mxu0 0.0
    %330 = vmatprep.mubr.f32.mxu0 0.0
    %331 = vmatmul.mubr.f32.gmra.mxu0 %v258
    %v332 = vpop.f32.mrf.mxu0
    %v333 = vadd.f32 %v256, %v332
    %v334 = vpop.f32.mrf.mxu0
    %335 = vmatprep.mubr.f32.mxu0 0.0
    %336 = vmatmul.mubr.f32.gmra.mxu0 %v261
    %v337 = vpop.f32.mrf.mxu0
    %v338 = vadd.f32 %v256, %v337
    %v339 = vpop.f32.mrf.mxu0
    %340 = vmatprep.mubr.f32.mxu0 0.0
    %341 = vmatmul.mubr.f32.gmra.mxu0 %v264
    %v342 = vpop.f32.mrf.mxu0
    %v343 = vadd.f32 %v256, %v342
    %v344 = vpop.f32.mrf.mxu0
    %345 = vdwg.mxu0
    %349 = vrot.lane.b32.xlu0 %v333, 96
    %v350 = vpop.permute.xlu0 %349
    %351 = vrot.lane.b32.xlu0 %v338, 96
    %v352 = vpop.permute.xlu0 %351
    %353 = vrot.lane.b32.xlu0 %v343, 96
    %v354 = vpop.permute.xlu0 %353
    %vm355 = vcmask 64512
    %v356 = vsel %vm355, %v333, 0
    %v358 = vsel %vm355, %v338, 0
    %v360 = vsel %vm355, %v343, 0
    %v362 = vsel %vm355, %v350, 0
    %v364 = vsel %vm355, %v352, 0
    %v366 = vsel %vm355, %v354, 0
    %368 = vmatprep.subr.mxu0 0.0
    %369 = vmatpush1.xpose.msra.mxu0 0.0
    %370 = vmatprep.subr.mxu0 0.0
    %371 = vmatpush1.xpose.msra.mxu0 0.0
    %372 = vmatprep.subr.mxu0 0.0
    %373 = vmatpush1.xpose.msra.mxu0 0.0
    %374 = vmatprep.subr.mxu0 0.0
    %375 = vmatpush1.xpose.msra.mxu0 0.0
    %376 = vmatprep.subr.mxu0 0.0
    %377 = vmatpush1.xpose.msra.mxu0 0.0
    %378 = vmatprep.subr.mxu0 0.0
    %379 = vmatpush1.xpose.msra.mxu0 0.0
    %380 = vmatprep.subr.mxu0 0.0
    %381 = vmatpush1.xpose.msra.mxu0 0.0
    %382 = vmatprep.subr.mxu0 0.0
    %383 = vmatpush1.xpose.msra.mxu0 0.0
    %384 = vmatprep.subr.mxu0 0.0
    %385 = vmatpush1.xpose.msra.mxu0 0.0
    %386 = vmatprep.subr.mxu0 0.0
    %387 = vmatpush1.xpose.msra.mxu0 0.0
    %388 = vmatprep.subr.mxu0 0.0
    %389 = vmatpush1.xpose.msra.mxu0 0.0
    %390 = vmatprep.subr.mxu0 0.0
    %391 = vmatpush1.xpose.msra.mxu0 0.0
    %392 = vmatprep.subr.mxu0 0.0
    %393 = vmatpush1.xpose.msra.mxu0 0.0
    %394 = vmatprep.subr.mxu0 0.0
    %395 = vmatpush1.xpose.msra.mxu0 %v366
    %396 = vmatprep.subr.mxu0 0.0
    %397 = vmatpush1.xpose.msra.mxu0 %v364
    %398 = vmatprep.subr.mxu0 0.0
    %399 = vmatpush1.xpose.msra.mxu0 %v362
    %400 = vmatprep.subr.mxu0 0.0
    %401 = vmatpush2.xpose.msra.mxu0 0.0
    %402 = vmatprep.subr.mxu0 0.0
    %403 = vmatpush2.xpose.msra.mxu0 0.0
    %404 = vmatprep.subr.mxu0 0.0
    %405 = vmatpush2.xpose.msra.mxu0 0.0
    %406 = vmatprep.subr.mxu0 0.0
    %407 = vmatpush2.xpose.msra.mxu0 0.0
    %408 = vmatprep.subr.mxu0 0.0
    %409 = vmatpush2.xpose.msra.mxu0 0.0
    %410 = vmatprep.subr.mxu0 0.0
    %411 = vmatpush2.xpose.msra.mxu0 0.0
    %412 = vmatprep.subr.mxu0 0.0
    %413 = vmatpush2.xpose.msra.mxu0 0.0
    %414 = vmatprep.subr.mxu0 0.0
    %415 = vmatpush2.xpose.msra.mxu0 0.0
    %416 = vmatprep.subr.mxu0 0.0
    %417 = vmatpush2.xpose.msra.mxu0 0.0
    %418 = vmatprep.subr.mxu0 0.0
    %419 = vmatpush2.xpose.msra.mxu0 0.0
    %420 = vmatprep.subr.mxu0 0.0
    %421 = vmatpush2.xpose.msra.mxu0 0.0
    %422 = vmatprep.subr.mxu0 0.0
    %423 = vmatpush2.xpose.msra.mxu0 0.0
    %424 = vmatprep.subr.mxu0 0.0
    %425 = vmatpush2.xpose.msra.mxu0 0.0
    %426 = vmatprep.subr.mxu0 0.0
    %427 = vmatpush2.xpose.msra.mxu0 0.0
    %428 = vmatprep.subr.mxu0 0.0
    %429 = vmatpush2.xpose.msra.mxu0 0.0
    %430 = vmatprep.subr.mxu0 0.0
    %431 = vmatpush2.xpose.msra.mxu0 0.0
    %432 = vmatprep.mubr.f32.mxu0 0.0
    %433 = vmatmul.mubr.f32.gmra.mxu0 %v356
    %v434 = vpop.f32.mrf.mxu0
    %v435 = vadd.f32 0.0, %v434
    %v436 = vpop.f32.mrf.mxu0
    %437 = vmatprep.mubr.f32.mxu0 0.0
    %438 = vmatmul.mubr.f32.gmra.mxu0 %v358
    %v439 = vpop.f32.mrf.mxu0
    %v440 = vadd.f32 0.0, %v439
    %v441 = vpop.f32.mrf.mxu0
    %442 = vmatprep.mubr.f32.mxu0 0.0
    %443 = vmatmul.mubr.f32.gmra.mxu0 %v360
    %v444 = vpop.f32.mrf.mxu0
    %v445 = vadd.f32 0.0, %v444
    %v446 = vpop.f32.mrf.mxu0
    %447 = vdwg.mxu0
    %vm448 = vcmask 138240
    %v449 = vsel %vm448, %v435, -inf
    %450 = vmax.xlane.f32.xlu0 %v449
    %v451 = vpop.xlane.xlu0 %450
    %v452 = vsel %vm448, %v440, -inf
    %453 = vmax.xlane.f32.xlu0 %v452
    %v454 = vpop.xlane.xlu0 %453
    %vm455 = vcmask 131072
    %v456 = vsel %vm455, %v445, -inf
    %457 = vmax.xlane.f32.xlu0 %v456
    %v458 = vpop.xlane.xlu0 %457
    %v459 = vsub.f32 %v435, %v451
    %v460 = vsub.f32 %v440, %v454
    %v461 = vsub.f32 %v445, %v458
    %v462 = vmul.f32 %v459, 1.442695
    %v463 = vpow.pop %v462
    %v464 = vmul.f32 %v460, 1.442695
    %v465 = vpow.pop %v464
    %v466 = vmul.f32 %v461, 1.442695
    %v467 = vpow.pop %v466
    %v468 = vsel %vm448, %v463, 0.0
    %469 = vadd.xlane.f32.xlu0 %v468
    %v470 = vpop.xlane.xlu0 %469
    %v471 = vsel %vm448, %v465, 0.0
    %472 = vadd.xlane.f32.xlu0 %v471
    %v473 = vpop.xlane.xlu0 %472
    %v474 = vsel %vm455, %v467, 0.0
    %475 = vadd.xlane.f32.xlu0 %v474
    %v476 = vpop.xlane.xlu0 %475
    %v477 = vrcp.pop %v470
    %v478 = vrcp.pop %v473
    %v479 = vrcp.pop %v476
    %v480 = vmul.f32 %v463, %v477
    %v481 = vmul.f32 %v465, %v478
    %v482 = vmul.f32 %v467, %v479
    %483 = vrot.lane.b32.xlu0 %v333, 64
    %v484 = vpop.permute.xlu0 %483
    %485 = vrot.lane.b32.xlu0 %v338, 64
    %v486 = vpop.permute.xlu0 %485
    %487 = vrot.lane.b32.xlu0 %v343, 64
    %v488 = vpop.permute.xlu0 %487
    %v492 = vsel %vm448, %v480, 0
    %v495 = vsel %vm448, %v481, 0
    %v498 = vsel %vm448, %v482, 0
    %vm500 = vcmask 1040384
    %v501 = vsel %vm500, %v488, 0
    %503 = vmatprep.subr.mxu0 0.0
    %504 = vmatpush1.msra.mxu0 0.0
    %505 = vmatprep.subr.mxu0 0.0
    %506 = vmatpush1.msra.mxu0 0.0
    %507 = vmatprep.subr.mxu0 0.0
    %508 = vmatpush1.msra.mxu0 0.0
    %509 = vmatprep.subr.mxu0 0.0
    %510 = vmatpush1.msra.mxu0 0.0
    %511 = vmatprep.subr.mxu0 0.0
    %512 = vmatpush1.msra.mxu0 0.0
    %513 = vmatprep.subr.mxu0 0.0
    %514 = vmatpush1.msra.mxu0 0.0
    %515 = vmatprep.subr.mxu0 0.0
    %516 = vmatpush1.msra.mxu0 0.0
    %517 = vmatprep.subr.mxu0 0.0
    %518 = vmatpush1.msra.mxu0 0.0
    %519 = vmatprep.subr.mxu0 0.0
    %520 = vmatpush1.msra.mxu0 0.0
    %521 = vmatprep.subr.mxu0 0.0
    %522 = vmatpush1.msra.mxu0 0.0
    %523 = vmatprep.subr.mxu0 0.0
    %524 = vmatpush1.msra.mxu0 0.0
    %525 = vmatprep.subr.mxu0 0.0
    %526 = vmatpush1.msra.mxu0 0.0
    %527 = vmatprep.subr.mxu0 0.0
    %528 = vmatpush1.msra.mxu0 0.0
    %529 = vmatprep.subr.mxu0 0.0
    %530 = vmatpush1.msra.mxu0 %v501
    %531 = vmatprep.subr.mxu0 0.0
    %532 = vmatpush1.msra.mxu0 %v486
    %533 = vmatprep.subr.mxu0 0.0
    %534 = vmatpush1.msra.mxu0 %v484
    %535 = vmatprep.subr.mxu0 0.0
    %536 = vmatpush2.msra.mxu0 0.0
    %537 = vmatprep.subr.mxu0 0.0
    %538 = vmatpush2.msra.mxu0 0.0
    %539 = vmatprep.subr.mxu0 0.0
    %540 = vmatpush2.msra.mxu0 0.0
    %541 = vmatprep.subr.mxu0 0.0
    %542 = vmatpush2.msra.mxu0 0.0
    %543 = vmatprep.subr.mxu0 0.0
    %544 = vmatpush2.msra.mxu0 0.0
    %545 = vmatprep.subr.mxu0 0.0
    %546 = vmatpush2.msra.mxu0 0.0
    %547 = vmatprep.subr.mxu0 0.0
    %548 = vmatpush2.msra.mxu0 0.0
    %549 = vmatprep.subr.mxu0 0.0
    %550 = vmatpush2.msra.mxu0 0.0
    %551 = vmatprep.subr.mxu0 0.0
    %552 = vmatpush2.msra.mxu0 0.0
    %553 = vmatprep.subr.mxu0 0.0
    %554 = vmatpush2.msra.mxu0 0.0
    %555 = vmatprep.subr.mxu0 0.0
    %556 = vmatpush2.msra.mxu0 0.0
    %557 = vmatprep.subr.mxu0 0.0
    %558 = vmatpush2.msra.mxu0 0.0
    %559 = vmatprep.subr.mxu0 0.0
    %560 = vmatpush2.msra.mxu0 0.0
    %561 = vmatprep.subr.mxu0 0.0
    %562 = vmatpush2.msra.mxu0 0.0
    %563 = vmatprep.subr.mxu0 0.0
    %564 = vmatpush2.msra.mxu0 0.0
    %565 = vmatprep.subr.mxu0 0.0
    %566 = vmatpush2.msra.mxu0 0.0
    %567 = vmatprep.mubr.f32.mxu0 0.0
    %568 = vmatmul.mubr.f32.gmra.mxu0 %v492
    %v569 = vpop.f32.mrf.mxu0
    %v570 = vadd.f32 0.0, %v569
    %v571 = vpop.f32.mrf.mxu0
    %572 = vmatprep.mubr.f32.mxu0 0.0
    %573 = vmatmul.mubr.f32.gmra.mxu0 %v495
    %v574 = vpop.f32.mrf.mxu0
    %v575 = vadd.f32 0.0, %v574
    %v576 = vpop.f32.mrf.mxu0
    %577 = vmatprep.mubr.f32.mxu0 0.0
    %578 = vmatmul.mubr.f32.gmra.mxu0 %v498
    %v579 = vpop.f32.mrf.mxu0
    %v580 = vadd.f32 0.0, %v579
    %v581 = vpop.f32.mrf.mxu0
    %582 = vdwg.mxu0
    %583 = vrot.lane.b32.xlu0 %v333, 120
    %v584 = vpop.permute.xlu0 %583
    %585 = vrot.lane.b32.xlu0 %v338, 120
    %v586 = vpop.permute.xlu0 %585
    %587 = vrot.lane.b32.xlu0 %v343, 120
    %v588 = vpop.permute.xlu0 %587
    %589 = vrot.lane.b32.xlu0 %v333, 88
    %v590 = vpop.permute.xlu0 %589
    %591 = vrot.lane.b32.xlu0 %v338, 88
    %v592 = vpop.permute.xlu0 %591
    %593 = vrot.lane.b32.xlu0 %v343, 88
    %v594 = vpop.permute.xlu0 %593
    %v595 = vsel %vm355, %v584, 0
    %v597 = vsel %vm355, %v586, 0
    %v599 = vsel %vm355, %v588, 0
    %v601 = vsel %vm355, %v590, 0
    %v603 = vsel %vm355, %v592, 0
    %v605 = vsel %vm355, %v594, 0
    %607 = vmatprep.subr.mxu0 0.0
    %608 = vmatpush1.xpose.msra.mxu0 0.0
    %609 = vmatprep.subr.mxu0 0.0
    %610 = vmatpush1.xpose.msra.mxu0 0.0
    %611 = vmatprep.subr.mxu0 0.0
    %612 = vmatpush1.xpose.msra.mxu0 0.0
    %613 = vmatprep.subr.mxu0 0.0
    %614 = vmatpush1.xpose.msra.mxu0 0.0
    %615 = vmatprep.subr.mxu0 0.0
    %616 = vmatpush1.xpose.msra.mxu0 0.0
    %617 = vmatprep.subr.mxu0 0.0
    %618 = vmatpush1.xpose.msra.mxu0 0.0
    %619 = vmatprep.subr.mxu0 0.0
    %620 = vmatpush1.xpose.msra.mxu0 0.0
    %621 = vmatprep.subr.mxu0 0.0
    %622 = vmatpush1.xpose.msra.mxu0 0.0
    %623 = vmatprep.subr.mxu0 0.0
    %624 = vmatpush1.xpose.msra.mxu0 0.0
    %625 = vmatprep.subr.mxu0 0.0
    %626 = vmatpush1.xpose.msra.mxu0 0.0
    %627 = vmatprep.subr.mxu0 0.0
    %628 = vmatpush1.xpose.msra.mxu0 0.0
    %629 = vmatprep.subr.mxu0 0.0
    %630 = vmatpush1.xpose.msra.mxu0 0.0
    %631 = vmatprep.subr.mxu0 0.0
    %632 = vmatpush1.xpose.msra.mxu0 0.0
    %633 = vmatprep.subr.mxu0 0.0
    %634 = vmatpush1.xpose.msra.mxu0 %v605
    %635 = vmatprep.subr.mxu0 0.0
    %636 = vmatpush1.xpose.msra.mxu0 %v603
    %637 = vmatprep.subr.mxu0 0.0
    %638 = vmatpush1.xpose.msra.mxu0 %v601
    %639 = vmatprep.subr.mxu0 0.0
    %640 = vmatpush2.xpose.msra.mxu0 0.0
    %641 = vmatprep.subr.mxu0 0.0
    %642 = vmatpush2.xpose.msra.mxu0 0.0
    %643 = vmatprep.subr.mxu0 0.0
    %644 = vmatpush2.xpose.msra.mxu0 0.0
    %645 = vmatprep.subr.mxu0 0.0
    %646 = vmatpush2.xpose.msra.mxu0 0.0
    %647 = vmatprep.subr.mxu0 0.0
    %648 = vmatpush2.xpose.msra.mxu0 0.0
    %649 = vmatprep.subr.mxu0 0.0
    %650 = vmatpush2.xpose.msra.mxu0 0.0
    %651 = vmatprep.subr.mxu0 0.0
    %652 = vmatpush2.xpose.msra.mxu0 0.0
    %653 = vmatprep.subr.mxu0 0.0
    %654 = vmatpush2.xpose.msra.mxu0 0.0
    %655 = vmatprep.subr.mxu0 0.0
    %656 = vmatpush2.xpose.msra.mxu0 0.0
    %657 = vmatprep.subr.mxu0 0.0
    %658 = vmatpush2.xpose.msra.mxu0 0.0
    %659 = vmatprep.subr.mxu0 0.0
    %660 = vmatpush2.xpose.msra.mxu0 0.0
    %661 = vmatprep.subr.mxu0 0.0
    %662 = vmatpush2.xpose.msra.mxu0 0.0
    %663 = vmatprep.subr.mxu0 0.0
    %664 = vmatpush2.xpose.msra.mxu0 0.0
    %665 = vmatprep.subr.mxu0 0.0
    %666 = vmatpush2.xpose.msra.mxu0 0.0
    %667 = vmatprep.subr.mxu0 0.0
    %668 = vmatpush2.xpose.msra.mxu0 0.0
    %669 = vmatprep.subr.mxu0 0.0
    %670 = vmatpush2.xpose.msra.mxu0 0.0
    %671 = vmatprep.mubr.f32.mxu0 0.0
    %672 = vmatmul.mubr.f32.gmra.mxu0 %v595
    %v673 = vpop.f32.mrf.mxu0
    %v674 = vadd.f32 0.0, %v673
    %v675 = vpop.f32.mrf.mxu0
    %676 = vmatprep.mubr.f32.mxu0 0.0
    %677 = vmatmul.mubr.f32.gmra.mxu0 %v597
    %v678 = vpop.f32.mrf.mxu0
    %v679 = vadd.f32 0.0, %v678
    %v680 = vpop.f32.mrf.mxu0
    %681 = vmatprep.mubr.f32.mxu0 0.0
    %682 = vmatmul.mubr.f32.gmra.mxu0 %v599
    %v683 = vpop.f32.mrf.mxu0
    %v684 = vadd.f32 0.0, %v683
    %v685 = vpop.f32.mrf.mxu0
    %686 = vdwg.mxu0
    %v687 = vsel %vm448, %v674, -inf
    %688 = vmax.xlane.f32.xlu0 %v687
    %v689 = vpop.xlane.xlu0 %688
    %v690 = vsel %vm448, %v679, -inf
    %691 = vmax.xlane.f32.xlu0 %v690
    %v692 = vpop.xlane.xlu0 %691
    %v693 = vsel %vm455, %v684, -inf
    %694 = vmax.xlane.f32.xlu0 %v693
    %v695 = vpop.xlane.xlu0 %694
    %v696 = vsub.f32 %v674, %v689
    %v697 = vsub.f32 %v679, %v692
    %v698 = vsub.f32 %v684, %v695
    %v699 = vmul.f32 %v696, 1.442695
    %v700 = vpow.pop %v699
    %v701 = vmul.f32 %v697, 1.442695
    %v702 = vpow.pop %v701
    %v703 = vmul.f32 %v698, 1.442695
    %v704 = vpow.pop %v703
    %v705 = vsel %vm448, %v700, 0.0
    %706 = vadd.xlane.f32.xlu0 %v705
    %v707 = vpop.xlane.xlu0 %706
    %v708 = vsel %vm448, %v702, 0.0
    %709 = vadd.xlane.f32.xlu0 %v708
    %v710 = vpop.xlane.xlu0 %709
    %v711 = vsel %vm455, %v704, 0.0
    %712 = vadd.xlane.f32.xlu0 %v711
    %v713 = vpop.xlane.xlu0 %712
    %v714 = vrcp.pop %v707
    %v715 = vrcp.pop %v710
    %v716 = vrcp.pop %v713
    %v717 = vmul.f32 %v700, %v714
    %v718 = vmul.f32 %v702, %v715
    %v719 = vmul.f32 %v704, %v716
    %720 = vrot.lane.b32.xlu0 %v333, 56
    %v721 = vpop.permute.xlu0 %720
    %722 = vrot.lane.b32.xlu0 %v338, 56
    %v723 = vpop.permute.xlu0 %722
    %724 = vrot.lane.b32.xlu0 %v343, 56
    %v725 = vpop.permute.xlu0 %724
    %v729 = vsel %vm448, %v717, 0
    %v732 = vsel %vm448, %v718, 0
    %v735 = vsel %vm448, %v719, 0
    %v737 = vsel %vm500, %v725, 0
    %739 = vmatprep.subr.mxu0 0.0
    %740 = vmatpush1.msra.mxu0 0.0
    %741 = vmatprep.subr.mxu0 0.0
    %742 = vmatpush1.msra.mxu0 0.0
    %743 = vmatprep.subr.mxu0 0.0
    %744 = vmatpush1.msra.mxu0 0.0
    %745 = vmatprep.subr.mxu0 0.0
    %746 = vmatpush1.msra.mxu0 0.0
    %747 = vmatprep.subr.mxu0 0.0
    %748 = vmatpush1.msra.mxu0 0.0
    %749 = vmatprep.subr.mxu0 0.0
    %750 = vmatpush1.msra.mxu0 0.0
    %751 = vmatprep.subr.mxu0 0.0
    %752 = vmatpush1.msra.mxu0 0.0
    %753 = vmatprep.subr.mxu0 0.0
    %754 = vmatpush1.msra.mxu0 0.0
    %755 = vmatprep.subr.mxu0 0.0
    %756 = vmatpush1.msra.mxu0 0.0
    %757 = vmatprep.subr.mxu0 0.0
    %758 = vmatpush1.msra.mxu0 0.0
    %759 = vmatprep.subr.mxu0 0.0
    %760 = vmatpush1.msra.mxu0 0.0
    %761 = vmatprep.subr.mxu0 0.0
    %762 = vmatpush1.msra.mxu0 0.0
    %763 = vmatprep.subr.mxu0 0.0
    %764 = vmatpush1.msra.mxu0 0.0
    %765 = vmatprep.subr.mxu0 0.0
    %766 = vmatpush1.msra.mxu0 %v737
    %767 = vmatprep.subr.mxu0 0.0
    %768 = vmatpush1.msra.mxu0 %v723
    %769 = vmatprep.subr.mxu0 0.0
    %770 = vmatpush1.msra.mxu0 %v721
    %771 = vmatprep.subr.mxu0 0.0
    %772 = vmatpush2.msra.mxu0 0.0
    %773 = vmatprep.subr.mxu0 0.0
    %774 = vmatpush2.msra.mxu0 0.0
    %775 = vmatprep.subr.mxu0 0.0
    %776 = vmatpush2.msra.mxu0 0.0
    %777 = vmatprep.subr.mxu0 0.0
    %778 = vmatpush2.msra.mxu0 0.0
    %779 = vmatprep.subr.mxu0 0.0
    %780 = vmatpush2.msra.mxu0 0.0
    %781 = vmatprep.subr.mxu0 0.0
    %782 = vmatpush2.msra.mxu0 0.0
    %783 = vmatprep.subr.mxu0 0.0
    %784 = vmatpush2.msra.mxu0 0.0
    %785 = vmatprep.subr.mxu0 0.0
    %786 = vmatpush2.msra.mxu0 0.0
    %787 = vmatprep.subr.mxu0 0.0
    %788 = vmatpush2.msra.mxu0 0.0
    %789 = vmatprep.subr.mxu0 0.0
    %790 = vmatpush2.msra.mxu0 0.0
    %791 = vmatprep.subr.mxu0 0.0
    %792 = vmatpush2.msra.mxu0 0.0
    %793 = vmatprep.subr.mxu0 0.0
    %794 = vmatpush2.msra.mxu0 0.0
    %795 = vmatprep.subr.mxu0 0.0
    %796 = vmatpush2.msra.mxu0 0.0
    %797 = vmatprep.subr.mxu0 0.0
    %798 = vmatpush2.msra.mxu0 0.0
    %799 = vmatprep.subr.mxu0 0.0
    %800 = vmatpush2.msra.mxu0 0.0
    %801 = vmatprep.subr.mxu0 0.0
    %802 = vmatpush2.msra.mxu0 0.0
    %803 = vmatprep.mubr.f32.mxu0 0.0
    %804 = vmatmul.mubr.f32.gmra.mxu0 %v729
    %v805 = vpop.f32.mrf.mxu0
    %v806 = vadd.f32 0.0, %v805
    %v807 = vpop.f32.mrf.mxu0
    %808 = vmatprep.mubr.f32.mxu0 0.0
    %809 = vmatmul.mubr.f32.gmra.mxu0 %v732
    %v810 = vpop.f32.mrf.mxu0
    %v811 = vadd.f32 0.0, %v810
    %v812 = vpop.f32.mrf.mxu0
    %813 = vmatprep.mubr.f32.mxu0 0.0
    %814 = vmatmul.mubr.f32.gmra.mxu0 %v735
    %v815 = vpop.f32.mrf.mxu0
    %v816 = vadd.f32 0.0, %v815
    %v817 = vpop.f32.mrf.mxu0
    %818 = vdwg.mxu0
    %819 = vrot.lane.b32.xlu0 %v333, 112
    %v820 = vpop.permute.xlu0 %819
    %821 = vrot.lane.b32.xlu0 %v338, 112
    %v822 = vpop.permute.xlu0 %821
    %823 = vrot.lane.b32.xlu0 %v343, 112
    %v824 = vpop.permute.xlu0 %823
    %825 = vrot.lane.b32.xlu0 %v333, 80
    %v826 = vpop.permute.xlu0 %825
    %827 = vrot.lane.b32.xlu0 %v338, 80
    %v828 = vpop.permute.xlu0 %827
    %829 = vrot.lane.b32.xlu0 %v343, 80
    %v830 = vpop.permute.xlu0 %829
    %v831 = vsel %vm355, %v820, 0
    %v833 = vsel %vm355, %v822, 0
    %v835 = vsel %vm355, %v824, 0
    %v837 = vsel %vm355, %v826, 0
    %v839 = vsel %vm355, %v828, 0
    %v841 = vsel %vm355, %v830, 0
    %843 = vmatprep.subr.mxu0 0.0
    %844 = vmatpush1.xpose.msra.mxu0 0.0
    %845 = vmatprep.subr.mxu0 0.0
    %846 = vmatpush1.xpose.msra.mxu0 0.0
    %847 = vmatprep.subr.mxu0 0.0
    %848 = vmatpush1.xpose.msra.mxu0 0.0
    %849 = vmatprep.subr.mxu0 0.0
    %850 = vmatpush1.xpose.msra.mxu0 0.0
    %851 = vmatprep.subr.mxu0 0.0
    %852 = vmatpush1.xpose.msra.mxu0 0.0
    %853 = vmatprep.subr.mxu0 0.0
    %854 = vmatpush1.xpose.msra.mxu0 0.0
    %855 = vmatprep.subr.mxu0 0.0
    %856 = vmatpush1.xpose.msra.mxu0 0.0
    %857 = vmatprep.subr.mxu0 0.0
    %858 = vmatpush1.xpose.msra.mxu0 0.0
    %859 = vmatprep.subr.mxu0 0.0
    %860 = vmatpush1.xpose.msra.mxu0 0.0
    %861 = vmatprep.subr.mxu0 0.0
    %862 = vmatpush1.xpose.msra.mxu0 0.0
    %863 = vmatprep.subr.mxu0 0.0
    %864 = vmatpush1.xpose.msra.mxu0 0.0
    %865 = vmatprep.subr.mxu0 0.0
    %866 = vmatpush1.xpose.msra.mxu0 0.0
    %867 = vmatprep.subr.mxu0 0.0
    %868 = vmatpush1.xpose.msra.mxu0 0.0
    %869 = vmatprep.subr.mxu0 0.0
    %870 = vmatpush1.xpose.msra.mxu0 %v841
    %871 = vmatprep.subr.mxu0 0.0
    %872 = vmatpush1.xpose.msra.mxu0 %v839
    %873 = vmatprep.subr.mxu0 0.0
    %874 = vmatpush1.xpose.msra.mxu0 %v837
    %875 = vmatprep.subr.mxu0 0.0
    %876 = vmatpush2.xpose.msra.mxu0 0.0
    %877 = vmatprep.subr.mxu0 0.0
    %878 = vmatpush2.xpose.msra.mxu0 0.0
    %879 = vmatprep.subr.mxu0 0.0
    %880 = vmatpush2.xpose.msra.mxu0 0.0
    %881 = vmatprep.subr.mxu0 0.0
    %882 = vmatpush2.xpose.msra.mxu0 0.0
    %883 = vmatprep.subr.mxu0 0.0
    %884 = vmatpush2.xpose.msra.mxu0 0.0
    %885 = vmatprep.subr.mxu0 0.0
    %886 = vmatpush2.xpose.msra.mxu0 0.0
    %887 = vmatprep.subr.mxu0 0.0
    %888 = vmatpush2.xpose.msra.mxu0 0.0
    %889 = vmatprep.subr.mxu0 0.0
    %890 = vmatpush2.xpose.msra.mxu0 0.0
    %891 = vmatprep.subr.mxu0 0.0
    %892 = vmatpush2.xpose.msra.mxu0 0.0
    %893 = vmatprep.subr.mxu0 0.0
    %894 = vmatpush2.xpose.msra.mxu0 0.0
    %895 = vmatprep.subr.mxu0 0.0
    %896 = vmatpush2.xpose.msra.mxu0 0.0
    %897 = vmatprep.subr.mxu0 0.0
    %898 = vmatpush2.xpose.msra.mxu0 0.0
    %899 = vmatprep.subr.mxu0 0.0
    %900 = vmatpush2.xpose.msra.mxu0 0.0
    %901 = vmatprep.subr.mxu0 0.0
    %902 = vmatpush2.xpose.msra.mxu0 0.0
    %903 = vmatprep.subr.mxu0 0.0
    %904 = vmatpush2.xpose.msra.mxu0 0.0
    %905 = vmatprep.subr.mxu0 0.0
    %906 = vmatpush2.xpose.msra.mxu0 0.0
    %907 = vmatprep.mubr.f32.mxu0 0.0
    %908 = vmatmul.mubr.f32.gmra.mxu0 %v831
    %v909 = vpop.f32.mrf.mxu0
    %v910 = vadd.f32 0.0, %v909
    %v911 = vpop.f32.mrf.mxu0
    %912 = vmatprep.mubr.f32.mxu0 0.0
    %913 = vmatmul.mubr.f32.gmra.mxu0 %v833
    %v914 = vpop.f32.mrf.mxu0
    %v915 = vadd.f32 0.0, %v914
    %v916 = vpop.f32.mrf.mxu0
    %917 = vmatprep.mubr.f32.mxu0 0.0
    %918 = vmatmul.mubr.f32.gmra.mxu0 %v835
    %v919 = vpop.f32.mrf.mxu0
    %v920 = vadd.f32 0.0, %v919
    %v921 = vpop.f32.mrf.mxu0
    %922 = vdwg.mxu0
    %v923 = vsel %vm448, %v910, -inf
    %924 = vmax.xlane.f32.xlu0 %v923
    %v925 = vpop.xlane.xlu0 %924
    %v926 = vsel %vm448, %v915, -inf
    %927 = vmax.xlane.f32.xlu0 %v926
    %v928 = vpop.xlane.xlu0 %927
    %v929 = vsel %vm455, %v920, -inf
    %930 = vmax.xlane.f32.xlu0 %v929
    %v931 = vpop.xlane.xlu0 %930
    %v932 = vsub.f32 %v910, %v925
    %v933 = vsub.f32 %v915, %v928
    %v934 = vsub.f32 %v920, %v931
    %v935 = vmul.f32 %v932, 1.442695
    %v936 = vpow.pop %v935
    %v937 = vmul.f32 %v933, 1.442695
    %v938 = vpow.pop %v937
    %v939 = vmul.f32 %v934, 1.442695
    %v940 = vpow.pop %v939
    %v941 = vsel %vm448, %v936, 0.0
    %942 = vadd.xlane.f32.xlu0 %v941
    %v943 = vpop.xlane.xlu0 %942
    %v944 = vsel %vm448, %v938, 0.0
    %945 = vadd.xlane.f32.xlu0 %v944
    %v946 = vpop.xlane.xlu0 %945
    %v947 = vsel %vm455, %v940, 0.0
    %948 = vadd.xlane.f32.xlu0 %v947
    %v949 = vpop.xlane.xlu0 %948
    %v950 = vrcp.pop %v943
    %v951 = vrcp.pop %v946
    %v952 = vrcp.pop %v949
    %v953 = vmul.f32 %v936, %v950
    %v954 = vmul.f32 %v938, %v951
    %v955 = vmul.f32 %v940, %v952
    %956 = vrot.lane.b32.xlu0 %v333, 48
    %v957 = vpop.permute.xlu0 %956
    %958 = vrot.lane.b32.xlu0 %v338, 48
    %v959 = vpop.permute.xlu0 %958
    %960 = vrot.lane.b32.xlu0 %v343, 48
    %v961 = vpop.permute.xlu0 %960
    %v965 = vsel %vm448, %v953, 0
    %v968 = vsel %vm448, %v954, 0
    %v971 = vsel %vm448, %v955, 0
    %v973 = vsel %vm500, %v961, 0
    %975 = vmatprep.subr.mxu0 0.0
    %976 = vmatpush1.msra.mxu0 0.0
    %977 = vmatprep.subr.mxu0 0.0
    %978 = vmatpush1.msra.mxu0 0.0
    %979 = vmatprep.subr.mxu0 0.0
    %980 = vmatpush1.msra.mxu0 0.0
    %981 = vmatprep.subr.mxu0 0.0
    %982 = vmatpush1.msra.mxu0 0.0
    %983 = vmatprep.subr.mxu0 0.0
    %984 = vmatpush1.msra.mxu0 0.0
    %985 = vmatprep.subr.mxu0 0.0
    %986 = vmatpush1.msra.mxu0 0.0
    %987 = vmatprep.subr.mxu0 0.0
    %988 = vmatpush1.msra.mxu0 0.0
    %989 = vmatprep.subr.mxu0 0.0
    %990 = vmatpush1.msra.mxu0 0.0
    %991 = vmatprep.subr.mxu0 0.0
    %992 = vmatpush1.msra.mxu0 0.0
    %993 = vmatprep.subr.mxu0 0.0
    %994 = vmatpush1.msra.mxu0 0.0
    %995 = vmatprep.subr.mxu0 0.0
    %996 = vmatpush1.msra.mxu0 0.0
    %997 = vmatprep.subr.mxu0 0.0
    %998 = vmatpush1.msra.mxu0 0.0
    %999 = vmatprep.subr.mxu0 0.0
    %1000 = vmatpush1.msra.mxu0 0.0
    %1001 = vmatprep.subr.mxu0 0.0
    %1002 = vmatpush1.msra.mxu0 %v973
    %1003 = vmatprep.subr.mxu0 0.0
    %1004 = vmatpush1.msra.mxu0 %v959
    %1005 = vmatprep.subr.mxu0 0.0
    %1006 = vmatpush1.msra.mxu0 %v957
    %1007 = vmatprep.subr.mxu0 0.0
    %1008 = vmatpush2.msra.mxu0 0.0
    %1009 = vmatprep.subr.mxu0 0.0
    %1010 = vmatpush2.msra.mxu0 0.0
    %1011 = vmatprep.subr.mxu0 0.0
    %1012 = vmatpush2.msra.mxu0 0.0
    %1013 = vmatprep.subr.mxu0 0.0
    %1014 = vmatpush2.msra.mxu0 0.0
    %1015 = vmatprep.subr.mxu0 0.0
    %1016 = vmatpush2.msra.mxu0 0.0
    %1017 = vmatprep.subr.mxu0 0.0
    %1018 = vmatpush2.msra.mxu0 0.0
    %1019 = vmatprep.subr.mxu0 0.0
    %1020 = vmatpush2.msra.mxu0 0.0
    %1021 = vmatprep.subr.mxu0 0.0
    %1022 = vmatpush2.msra.mxu0 0.0
    %1023 = vmatprep.subr.mxu0 0.0
    %1024 = vmatpush2.msra.mxu0 0.0
    %1025 = vmatprep.subr.mxu0 0.0
    %1026 = vmatpush2.msra.mxu0 0.0
    %1027 = vmatprep.subr.mxu0 0.0
    %1028 = vmatpush2.msra.mxu0 0.0
    %1029 = vmatprep.subr.mxu0 0.0
    %1030 = vmatpush2.msra.mxu0 0.0
    %1031 = vmatprep.subr.mxu0 0.0
    %1032 = vmatpush2.msra.mxu0 0.0
    %1033 = vmatprep.subr.mxu0 0.0
    %1034 = vmatpush2.msra.mxu0 0.0
    %1035 = vmatprep.subr.mxu0 0.0
    %1036 = vmatpush2.msra.mxu0 0.0
    %1037 = vmatprep.subr.mxu0 0.0
    %1038 = vmatpush2.msra.mxu0 0.0
    %1039 = vmatprep.mubr.f32.mxu0 0.0
    %1040 = vmatmul.mubr.f32.gmra.mxu0 %v965
    %v1041 = vpop.f32.mrf.mxu0
    %v1042 = vadd.f32 0.0, %v1041
    %v1043 = vpop.f32.mrf.mxu0
    %1044 = vmatprep.mubr.f32.mxu0 0.0
    %1045 = vmatmul.mubr.f32.gmra.mxu0 %v968
    %v1046 = vpop.f32.mrf.mxu0
    %v1047 = vadd.f32 0.0, %v1046
    %v1048 = vpop.f32.mrf.mxu0
    %1049 = vmatprep.mubr.f32.mxu0 0.0
    %1050 = vmatmul.mubr.f32.gmra.mxu0 %v971
    %v1051 = vpop.f32.mrf.mxu0
    %v1052 = vadd.f32 0.0, %v1051
    %v1053 = vpop.f32.mrf.mxu0
    %1054 = vdwg.mxu0
    %1055 = vrot.lane.b32.xlu0 %v333, 104
    %v1056 = vpop.permute.xlu0 %1055
    %1057 = vrot.lane.b32.xlu0 %v338, 104
    %v1058 = vpop.permute.xlu0 %1057
    %1059 = vrot.lane.b32.xlu0 %v343, 104
    %v1060 = vpop.permute.xlu0 %1059
    %1061 = vrot.lane.b32.xlu0 %v333, 72
    %v1062 = vpop.permute.xlu0 %1061
    %1063 = vrot.lane.b32.xlu0 %v338, 72
    %v1064 = vpop.permute.xlu0 %1063
    %1065 = vrot.lane.b32.xlu0 %v343, 72
    %v1066 = vpop.permute.xlu0 %1065
    %v1067 = vsel %vm355, %v1056, 0
    %v1069 = vsel %vm355, %v1058, 0
    %v1071 = vsel %vm355, %v1060, 0
    %v1073 = vsel %vm355, %v1062, 0
    %v1075 = vsel %vm355, %v1064, 0
    %v1077 = vsel %vm355, %v1066, 0
    %1079 = vmatprep.subr.mxu0 0.0
    %1080 = vmatpush1.xpose.msra.mxu0 0.0
    %1081 = vmatprep.subr.mxu0 0.0
    %1082 = vmatpush1.xpose.msra.mxu0 0.0
    %1083 = vmatprep.subr.mxu0 0.0
    %1084 = vmatpush1.xpose.msra.mxu0 0.0
    %1085 = vmatprep.subr.mxu0 0.0
    %1086 = vmatpush1.xpose.msra.mxu0 0.0
    %1087 = vmatprep.subr.mxu0 0.0
    %1088 = vmatpush1.xpose.msra.mxu0 0.0
    %1089 = vmatprep.subr.mxu0 0.0
    %1090 = vmatpush1.xpose.msra.mxu0 0.0
    %1091 = vmatprep.subr.mxu0 0.0
    %1092 = vmatpush1.xpose.msra.mxu0 0.0
    %1093 = vmatprep.subr.mxu0 0.0
    %1094 = vmatpush1.xpose.msra.mxu0 0.0
    %1095 = vmatprep.subr.mxu0 0.0
    %1096 = vmatpush1.xpose.msra.mxu0 0.0
    %1097 = vmatprep.subr.mxu0 0.0
    %1098 = vmatpush1.xpose.msra.mxu0 0.0
    %1099 = vmatprep.subr.mxu0 0.0
    %1100 = vmatpush1.xpose.msra.mxu0 0.0
    %1101 = vmatprep.subr.mxu0 0.0
    %1102 = vmatpush1.xpose.msra.mxu0 0.0
    %1103 = vmatprep.subr.mxu0 0.0
    %1104 = vmatpush1.xpose.msra.mxu0 0.0
    %1105 = vmatprep.subr.mxu0 0.0
    %1106 = vmatpush1.xpose.msra.mxu0 %v1077
    %1107 = vmatprep.subr.mxu0 0.0
    %1108 = vmatpush1.xpose.msra.mxu0 %v1075
    %1109 = vmatprep.subr.mxu0 0.0
    %1110 = vmatpush1.xpose.msra.mxu0 %v1073
    %1111 = vmatprep.subr.mxu0 0.0
    %1112 = vmatpush2.xpose.msra.mxu0 0.0
    %1113 = vmatprep.subr.mxu0 0.0
    %1114 = vmatpush2.xpose.msra.mxu0 0.0
    %1115 = vmatprep.subr.mxu0 0.0
    %1116 = vmatpush2.xpose.msra.mxu0 0.0
    %1117 = vmatprep.subr.mxu0 0.0
    %1118 = vmatpush2.xpose.msra.mxu0 0.0
    %1119 = vmatprep.subr.mxu0 0.0
    %1120 = vmatpush2.xpose.msra.mxu0 0.0
    %1121 = vmatprep.subr.mxu0 0.0
    %1122 = vmatpush2.xpose.msra.mxu0 0.0
    %1123 = vmatprep.subr.mxu0 0.0
    %1124 = vmatpush2.xpose.msra.mxu0 0.0
    %1125 = vmatprep.subr.mxu0 0.0
    %1126 = vmatpush2.xpose.msra.mxu0 0.0
    %1127 = vmatprep.subr.mxu0 0.0
    %1128 = vmatpush2.xpose.msra.mxu0 0.0
    %1129 = vmatprep.subr.mxu0 0.0
    %1130 = vmatpush2.xpose.msra.mxu0 0.0
    %1131 = vmatprep.subr.mxu0 0.0
    %1132 = vmatpush2.xpose.msra.mxu0 0.0
    %1133 = vmatprep.subr.mxu0 0.0
    %1134 = vmatpush2.xpose.msra.mxu0 0.0
    %1135 = vmatprep.subr.mxu0 0.0
    %1136 = vmatpush2.xpose.msra.mxu0 0.0
    %1137 = vmatprep.subr.mxu0 0.0
    %1138 = vmatpush2.xpose.msra.mxu0 0.0
    %1139 = vmatprep.subr.mxu0 0.0
    %1140 = vmatpush2.xpose.msra.mxu0 0.0
    %1141 = vmatprep.subr.mxu0 0.0
    %1142 = vmatpush2.xpose.msra.mxu0 0.0
    %1143 = vmatprep.mubr.f32.mxu0 0.0
    %1144 = vmatmul.mubr.f32.gmra.mxu0 %v1067
    %v1145 = vpop.f32.mrf.mxu0
    %v1146 = vadd.f32 0.0, %v1145
    %v1147 = vpop.f32.mrf.mxu0
    %1148 = vmatprep.mubr.f32.mxu0 0.0
    %1149 = vmatmul.mubr.f32.gmra.mxu0 %v1069
    %v1150 = vpop.f32.mrf.mxu0
    %v1151 = vadd.f32 0.0, %v1150
    %v1152 = vpop.f32.mrf.mxu0
    %1153 = vmatprep.mubr.f32.mxu0 0.0
    %1154 = vmatmul.mubr.f32.gmra.mxu0 %v1071
    %v1155 = vpop.f32.mrf.mxu0
    %v1156 = vadd.f32 0.0, %v1155
    %v1157 = vpop.f32.mrf.mxu0
    %1158 = vdwg.mxu0
    %v1159 = vsel %vm448, %v1146, -inf
    %1160 = vmax.xlane.f32.xlu0 %v1159
    %v1161 = vpop.xlane.xlu0 %1160
    %v1162 = vsel %vm448, %v1151, -inf
    %1163 = vmax.xlane.f32.xlu0 %v1162
    %v1164 = vpop.xlane.xlu0 %1163
    %v1165 = vsel %vm455, %v1156, -inf
    %1166 = vmax.xlane.f32.xlu0 %v1165
    %v1167 = vpop.xlane.xlu0 %1166
    %v1168 = vsub.f32 %v1146, %v1161
    %v1169 = vsub.f32 %v1151, %v1164
    %v1170 = vsub.f32 %v1156, %v1167
    %v1171 = vmul.f32 %v1168, 1.442695
    %v1172 = vpow.pop %v1171
    %v1173 = vmul.f32 %v1169, 1.442695
    %v1174 = vpow.pop %v1173
    %v1175 = vmul.f32 %v1170, 1.442695
    %v1176 = vpow.pop %v1175
    %v1177 = vsel %vm448, %v1172, 0.0
    %1178 = vadd.xlane.f32.xlu0 %v1177
    %v1179 = vpop.xlane.xlu0 %1178
    %v1180 = vsel %vm448, %v1174, 0.0
    %1181 = vadd.xlane.f32.xlu0 %v1180
    %v1182 = vpop.xlane.xlu0 %1181
    %v1183 = vsel %vm455, %v1176, 0.0
    %1184 = vadd.xlane.f32.xlu0 %v1183
    %v1185 = vpop.xlane.xlu0 %1184
    %v1186 = vrcp.pop %v1179
    %v1187 = vrcp.pop %v1182
    %v1188 = vrcp.pop %v1185
    %v1189 = vmul.f32 %v1172, %v1186
    %v1190 = vmul.f32 %v1174, %v1187
    %v1191 = vmul.f32 %v1176, %v1188
    %1192 = vrot.lane.b32.xlu0 %v333, 40
    %v1193 = vpop.permute.xlu0 %1192
    %1194 = vrot.lane.b32.xlu0 %v338, 40
    %v1195 = vpop.permute.xlu0 %1194
    %1196 = vrot.lane.b32.xlu0 %v343, 40
    %v1197 = vpop.permute.xlu0 %1196
    %v1201 = vsel %vm448, %v1189, 0
    %v1204 = vsel %vm448, %v1190, 0
    %v1207 = vsel %vm448, %v1191, 0
    %v1209 = vsel %vm500, %v1197, 0
    %1211 = vmatprep.subr.mxu0 0.0
    %1212 = vmatpush1.msra.mxu0 0.0
    %1213 = vmatprep.subr.mxu0 0.0
    %1214 = vmatpush1.msra.mxu0 0.0
    %1215 = vmatprep.subr.mxu0 0.0
    %1216 = vmatpush1.msra.mxu0 0.0
    %1217 = vmatprep.subr.mxu0 0.0
    %1218 = vmatpush1.msra.mxu0 0.0
    %1219 = vmatprep.subr.mxu0 0.0
    %1220 = vmatpush1.msra.mxu0 0.0
    %1221 = vmatprep.subr.mxu0 0.0
    %1222 = vmatpush1.msra.mxu0 0.0
    %1223 = vmatprep.subr.mxu0 0.0
    %1224 = vmatpush1.msra.mxu0 0.0
    %1225 = vmatprep.subr.mxu0 0.0
    %1226 = vmatpush1.msra.mxu0 0.0
    %1227 = vmatprep.subr.mxu0 0.0
    %1228 = vmatpush1.msra.mxu0 0.0
    %1229 = vmatprep.subr.mxu0 0.0
    %1230 = vmatpush1.msra.mxu0 0.0
    %1231 = vmatprep.subr.mxu0 0.0
    %1232 = vmatpush1.msra.mxu0 0.0
    %1233 = vmatprep.subr.mxu0 0.0
    %1234 = vmatpush1.msra.mxu0 0.0
    %1235 = vmatprep.subr.mxu0 0.0
    %1236 = vmatpush1.msra.mxu0 0.0
    %1237 = vmatprep.subr.mxu0 0.0
    %1238 = vmatpush1.msra.mxu0 %v1209
    %1239 = vmatprep.subr.mxu0 0.0
    %1240 = vmatpush1.msra.mxu0 %v1195
    %1241 = vmatprep.subr.mxu0 0.0
    %1242 = vmatpush1.msra.mxu0 %v1193
    %1243 = vmatprep.subr.mxu0 0.0
    %1244 = vmatpush2.msra.mxu0 0.0
    %1245 = vmatprep.subr.mxu0 0.0
    %1246 = vmatpush2.msra.mxu0 0.0
    %1247 = vmatprep.subr.mxu0 0.0
    %1248 = vmatpush2.msra.mxu0 0.0
    %1249 = vmatprep.subr.mxu0 0.0
    %1250 = vmatpush2.msra.mxu0 0.0
    %1251 = vmatprep.subr.mxu0 0.0
    %1252 = vmatpush2.msra.mxu0 0.0
    %1253 = vmatprep.subr.mxu0 0.0
    %1254 = vmatpush2.msra.mxu0 0.0
    %1255 = vmatprep.subr.mxu0 0.0
    %1256 = vmatpush2.msra.mxu0 0.0
    %1257 = vmatprep.subr.mxu0 0.0
    %1258 = vmatpush2.msra.mxu0 0.0
    %1259 = vmatprep.subr.mxu0 0.0
    %1260 = vmatpush2.msra.mxu0 0.0
    %1261 = vmatprep.subr.mxu0 0.0
    %1262 = vmatpush2.msra.mxu0 0.0
    %1263 = vmatprep.subr.mxu0 0.0
    %1264 = vmatpush2.msra.mxu0 0.0
    %1265 = vmatprep.subr.mxu0 0.0
    %1266 = vmatpush2.msra.mxu0 0.0
    %1267 = vmatprep.subr.mxu0 0.0
    %1268 = vmatpush2.msra.mxu0 0.0
    %1269 = vmatprep.subr.mxu0 0.0
    %1270 = vmatpush2.msra.mxu0 0.0
    %1271 = vmatprep.subr.mxu0 0.0
    %1272 = vmatpush2.msra.mxu0 0.0
    %1273 = vmatprep.subr.mxu0 0.0
    %1274 = vmatpush2.msra.mxu0 0.0
    %1275 = vmatprep.mubr.f32.mxu0 0.0
    %1276 = vmatmul.mubr.f32.gmra.mxu0 %v1201
    %v1277 = vpop.f32.mrf.mxu0
    %v1278 = vadd.f32 0.0, %v1277
    %v1279 = vpop.f32.mrf.mxu0
    %1280 = vmatprep.mubr.f32.mxu0 0.0
    %1281 = vmatmul.mubr.f32.gmra.mxu0 %v1204
    %v1282 = vpop.f32.mrf.mxu0
    %v1283 = vadd.f32 0.0, %v1282
    %v1284 = vpop.f32.mrf.mxu0
    %1285 = vmatprep.mubr.f32.mxu0 0.0
    %1286 = vmatmul.mubr.f32.gmra.mxu0 %v1207
    %v1287 = vpop.f32.mrf.mxu0
    %v1288 = vadd.f32 0.0, %v1287
    %v1289 = vpop.f32.mrf.mxu0
    %1290 = vdwg.mxu0
    %1294 = vrot.lane.b32.xlu0 %v806, 8
    %v1295 = vpop.permute.xlu0 %1294
    %1296 = vrot.lane.b32.xlu0 %v811, 8
    %v1297 = vpop.permute.xlu0 %1296
    %1298 = vrot.lane.b32.xlu0 %v816, 8
    %v1299 = vpop.permute.xlu0 %1298
    %1306 = vrot.lane.b32.xlu0 %v1042, 16
    %v1307 = vpop.permute.xlu0 %1306
    %1308 = vrot.lane.b32.xlu0 %v1047, 16
    %v1309 = vpop.permute.xlu0 %1308
    %1310 = vrot.lane.b32.xlu0 %v1052, 16
    %v1311 = vpop.permute.xlu0 %1310
    %1318 = vrot.lane.b32.xlu0 %v1278, 24
    %v1319 = vpop.permute.xlu0 %1318
    %1320 = vrot.lane.b32.xlu0 %v1283, 24
    %v1321 = vpop.permute.xlu0 %1320
    %1322 = vrot.lane.b32.xlu0 %v1288, 24
    %v1323 = vpop.permute.xlu0 %1322
    %v1327 = vsel %vm355, %v570, %v1295
    %v1328 = vsel %vm355, %v575, %v1297
    %v1329 = vsel %vm355, %v580, %v1299
    %vm1330 = vcmask 130048
    %v1331 = vsel %vm1330, %v1327, %v1307
    %v1332 = vsel %vm1330, %v1328, %v1309
    %v1333 = vsel %vm1330, %v1329, %v1311
    %vm1334 = vcmask 195584
    %v1335 = vsel %vm1334, %v1331, %v1319
    %v1336 = vsel %vm1334, %v1332, %v1321
    %v1337 = vsel %vm1334, %v1333, %v1323
    %v1338 = vld [vmem:[%s4] sm:$0xff]
    %v1339 = vld [vmem:[%s4 + $0x8] sm:$0xff]
    %v1340 = vld [vmem:[%s4 + $0x10] sm:$0xff]
    %v1341 = vld [vmem:[%s4 + $0x18] sm:$0xff]
    %v1342 = vld [vmem:[%s8 + $0x5] sm:$0x1]
    %v1343 = vlaneseq
    %v1344 = vshrl.u32 %v1343, 7
    %v1345 = vsub.s32 0, %v1344
    %v1346 = vrot.slane %v1342, %v1345
    %v1348 = vsel %vm137, %v1335, 0
    %v1351 = vsel %vm137, %v1336, 0
    %v1354 = vsel %vm137, %v1337, 0
    %1356 = vmatprep.subr.mxu0 0.0
    %1357 = vmatpush1.msra.mxu0 0.0
    %1358 = vmatprep.subr.mxu0 0.0
    %1359 = vmatpush1.msra.mxu0 0.0
    %1360 = vmatprep.subr.mxu0 0.0
    %1361 = vmatpush1.msra.mxu0 0.0
    %1362 = vmatprep.subr.mxu0 0.0
    %1363 = vmatpush1.msra.mxu0 0.0
    %1364 = vmatprep.subr.mxu0 0.0
    %1365 = vmatpush1.msra.mxu0 0.0
    %1366 = vmatprep.subr.mxu0 0.0
    %1367 = vmatpush1.msra.mxu0 0.0
    %1368 = vmatprep.subr.mxu0 0.0
    %1369 = vmatpush1.msra.mxu0 0.0
    %1370 = vmatprep.subr.mxu0 0.0
    %1371 = vmatpush1.msra.mxu0 0.0
    %1372 = vmatprep.subr.mxu0 0.0
    %1373 = vmatpush1.msra.mxu0 0.0
    %1374 = vmatprep.subr.mxu0 0.0
    %1375 = vmatpush1.msra.mxu0 0.0
    %1376 = vmatprep.subr.mxu0 0.0
    %1377 = vmatpush1.msra.mxu0 0.0
    %1378 = vmatprep.subr.mxu0 0.0
    %1379 = vmatpush1.msra.mxu0 0.0
    %1380 = vmatprep.subr.mxu0 0.0
    %1381 = vmatpush1.msra.mxu0 %v1341
    %1382 = vmatprep.subr.mxu0 0.0
    %1383 = vmatpush1.msra.mxu0 %v1340
    %1384 = vmatprep.subr.mxu0 0.0
    %1385 = vmatpush1.msra.mxu0 %v1339
    %1386 = vmatprep.subr.mxu0 0.0
    %1387 = vmatpush1.msra.mxu0 %v1338
    %1388 = vmatprep.subr.mxu0 0.0
    %1389 = vmatpush2.msra.mxu0 0.0
    %1390 = vmatprep.subr.mxu0 0.0
    %1391 = vmatpush2.msra.mxu0 0.0
    %1392 = vmatprep.subr.mxu0 0.0
    %1393 = vmatpush2.msra.mxu0 0.0
    %1394 = vmatprep.subr.mxu0 0.0
    %1395 = vmatpush2.msra.mxu0 0.0
    %1396 = vmatprep.subr.mxu0 0.0
    %1397 = vmatpush2.msra.mxu0 0.0
    %1398 = vmatprep.subr.mxu0 0.0
    %1399 = vmatpush2.msra.mxu0 0.0
    %1400 = vmatprep.subr.mxu0 0.0
    %1401 = vmatpush2.msra.mxu0 0.0
    %1402 = vmatprep.subr.mxu0 0.0
    %1403 = vmatpush2.msra.mxu0 0.0
    %1404 = vmatprep.subr.mxu0 0.0
    %1405 = vmatpush2.msra.mxu0 0.0
    %1406 = vmatprep.subr.mxu0 0.0
    %1407 = vmatpush2.msra.mxu0 0.0
    %1408 = vmatprep.subr.mxu0 0.0
    %1409 = vmatpush2.msra.mxu0 0.0
    %1410 = vmatprep.subr.mxu0 0.0
    %1411 = vmatpush2.msra.mxu0 0.0
    %1412 = vmatprep.subr.mxu0 0.0
    %1413 = vmatpush2.msra.mxu0 0.0
    %1414 = vmatprep.subr.mxu0 0.0
    %1415 = vmatpush2.msra.mxu0 0.0
    %1416 = vmatprep.subr.mxu0 0.0
    %1417 = vmatpush2.msra.mxu0 0.0
    %1418 = vmatprep.subr.mxu0 0.0
    %1419 = vmatpush2.msra.mxu0 0.0
    %1420 = vmatprep.mubr.f32.mxu0 0.0
    %1421 = vmatmul.mubr.f32.gmra.mxu0 %v1348
    %v1422 = vpop.f32.mrf.mxu0
    %v1423 = vadd.f32 %v1346, %v1422
    %v1424 = vpop.f32.mrf.mxu0
    %1425 = vmatprep.mubr.f32.mxu0 0.0
    %1426 = vmatmul.mubr.f32.gmra.mxu0 %v1351
    %v1427 = vpop.f32.mrf.mxu0
    %v1428 = vadd.f32 %v1346, %v1427
    %v1429 = vpop.f32.mrf.mxu0
    %1430 = vmatprep.mubr.f32.mxu0 0.0
    %1431 = vmatmul.mubr.f32.gmra.mxu0 %v1354
    %v1432 = vpop.f32.mrf.mxu0
    %v1433 = vadd.f32 %v1346, %v1432
    %v1434 = vpop.f32.mrf.mxu0
    %1435 = vdwg.mxu0
    %v1436 = vadd.f32 %v190, %v1423
    %v1437 = vadd.f32 %v191, %v1428
    %v1438 = vadd.f32 %v192, %v1433
    %v1439 = vld [vmem:[%s8 + $0x6] sm:$0x1]
    %v1440 = vld [vmem:[%s8 + $0x7] sm:$0x1]
    %v1441 = vsel %vm137, %v1436, 0.0
    %1442 = vadd.xlane.f32.xlu0 %v1441
    %v1443 = vpop.xlane.xlu0 %1442
    %v1444 = vsel %vm137, %v1437, 0.0
    %1445 = vadd.xlane.f32.xlu0 %v1444
    %v1446 = vpop.xlane.xlu0 %1445
    %v1447 = vsel %vm144, %v1438, 0.0
    %1448 = vadd.xlane.f32.xlu0 %v1447
    %v1449 = vpop.xlane.xlu0 %1448
    %v1450 = vmul.f32 %v1443, %v148
    %v1451 = vmul.f32 %v1446, %v148
    %v1452 = vmul.f32 %v1449, %v148
    %v1453 = vsub.f32 %v1436, %v1450
    %v1454 = vsub.f32 %v1437, %v1451
    %v1455 = vsub.f32 %v1438, %v1452
    %v1456 = vmul.f32 %v1453, %v1453
    %v1457 = vmul.f32 %v1454, %v1454
    %v1458 = vmul.f32 %v1455, %v1455
    %v1459 = vsel %vm137, %v1456, 0.0
    %1460 = vadd.xlane.f32.xlu0 %v1459
    %v1461 = vpop.xlane.xlu0 %1460
    %v1462 = vsel %vm137, %v1457, 0.0
    %1463 = vadd.xlane.f32.xlu0 %v1462
    %v1464 = vpop.xlane.xlu0 %1463
    %v1465 = vsel %vm144, %v1458, 0.0
    %1466 = vadd.xlane.f32.xlu0 %v1465
    %v1467 = vpop.xlane.xlu0 %1466
    %v1468 = vmul.f32 %v1461, %v148
    %v1469 = vmul.f32 %v1464, %v148
    %v1470 = vmul.f32 %v1467, %v148
    %v1471 = vadd.f32 %v1468, 1e-05
    %v1472 = vadd.f32 %v1469, 1e-05
    %v1473 = vadd.f32 %v1470, 1e-05
    %v1474 = vrsqrt.pop %v1471
    %v1475 = vrsqrt.pop %v1472
    %v1476 = vrsqrt.pop %v1473
    %v1477 = vmul.f32 %v1453, %v1474
    %v1478 = vmul.f32 %v1454, %v1475
    %v1479 = vmul.f32 %v1455, %v1476
    %v1480 = vlaneseq
    %v1481 = vshrl.u32 %v1480, 7
    %v1482 = vsub.s32 0, %v1481
    %v1483 = vrot.slane %v1439, %v1482
    %v1484 = vmul.f32 %v1477, %v1483
    %v1485 = vmul.f32 %v1478, %v1483
    %v1486 = vmul.f32 %v1479, %v1483
    %v1487 = vlaneseq
    %v1488 = vshrl.u32 %v1487, 7
    %v1489 = vsub.s32 0, %v1488
    %v1490 = vrot.slane %v1440, %v1489
    %v1491 = vadd.f32 %v1484, %v1490
    %v1492 = vadd.f32 %v1485, %v1490
    %v1493 = vadd.f32 %v1486, %v1490
    %v1494 = vld [vmem:[%s5] sm:$0xff]
    %v1495 = vld [vmem:[%s5 + $0x8] sm:$0xff]
    %v1496 = vld [vmem:[%s5 + $0x10] sm:$0xff]
    %v1497 = vld [vmem:[%s5 + $0x18] sm:$0xff]
    %v1498 = vld [vmem:[%s8 + $0x8] sm:$0x1]
    %v1499 = vlaneseq
    %v1500 = vshrl.u32 %v1499, 7
    %v1501 = vsub.s32 0, %v1500
    %v1502 = vrot.slane %v1498, %v1501
    %v1504 = vsel %vm137, %v1491, 0
    %v1507 = vsel %vm137, %v1492, 0
    %v1510 = vsel %vm137, %v1493, 0
    %1512 = vmatprep.subr.mxu0 0.0
    %1513 = vmatpush1.msra.mxu0 0.0
    %1514 = vmatprep.subr.mxu0 0.0
    %1515 = vmatpush1.msra.mxu0 0.0
    %1516 = vmatprep.subr.mxu0 0.0
    %1517 = vmatpush1.msra.mxu0 0.0
    %1518 = vmatprep.subr.mxu0 0.0
    %1519 = vmatpush1.msra.mxu0 0.0
    %1520 = vmatprep.subr.mxu0 0.0
    %1521 = vmatpush1.msra.mxu0 0.0
    %1522 = vmatprep.subr.mxu0 0.0
    %1523 = vmatpush1.msra.mxu0 0.0
    %1524 = vmatprep.subr.mxu0 0.0
    %1525 = vmatpush1.msra.mxu0 0.0
    %1526 = vmatprep.subr.mxu0 0.0
    %1527 = vmatpush1.msra.mxu0 0.0
    %1528 = vmatprep.subr.mxu0 0.0
    %1529 = vmatpush1.msra.mxu0 0.0
    %1530 = vmatprep.subr.mxu0 0.0
    %1531 = vmatpush1.msra.mxu0 0.0
    %1532 = vmatprep.subr.mxu0 0.0
    %1533 = vmatpush1.msra.mxu0 0.0
    %1534 = vmatprep.subr.mxu0 0.0
    %1535 = vmatpush1.msra.mxu0 0.0
    %1536 = vmatprep.subr.mxu0 0.0
    %1537 = vmatpush1.msra.mxu0 %v1497
    %1538 = vmatprep.subr.mxu0 0.0
    %1539 = vmatpush1.msra.mxu0 %v1496
    %1540 = vmatprep.subr.mxu0 0.0
    %1541 = vmatpush1.msra.mxu0 %v1495
    %1542 = vmatprep.subr.mxu0 0.0
    %1543 = vmatpush1.msra.mxu0 %v1494
    %1544 = vmatprep.subr.mxu0 0.0
    %1545 = vmatpush2.msra.mxu0 0.0
    %1546 = vmatprep.subr.mxu0 0.0
    %1547 = vmatpush2.msra.mxu0 0.0
    %1548 = vmatprep.subr.mxu0 0.0
    %1549 = vmatpush2.msra.mxu0 0.0
    %1550 = vmatprep.subr.mxu0 0.0
    %1551 = vmatpush2.msra.mxu0 0.0
    %1552 = vmatprep.subr.mxu0 0.0
    %1553 = vmatpush2.msra.mxu0 0.0
    %1554 = vmatprep.subr.mxu0 0.0
    %1555 = vmatpush2.msra.mxu0 0.0
    %1556 = vmatprep.subr.mxu0 0.0
    %1557 = vmatpush2.msra.mxu0 0.0
    %1558 = vmatprep.subr.mxu0 0.0
    %1559 = vmatpush2.msra.mxu0 0.0
    %1560 = vmatprep.subr.mxu0 0.0
    %1561 = vmatpush2.msra.mxu0 0.0
    %1562 = vmatprep.subr.mxu0 0.0
    %1563 = vmatpush2.msra.mxu0 0.0
    %1564 = vmatprep.subr.mxu0 0.0
    %1565 = vmatpush2.msra.mxu0 0.0
    %1566 = vmatprep.subr.mxu0 0.0
    %1567 = vmatpush2.msra.mxu0 0.0
    %1568 = vmatprep.subr.mxu0 0.0
    %1569 = vmatpush2.msra.mxu0 0.0
    %1570 = vmatprep.subr.mxu0 0.0
    %1571 = vmatpush2.msra.mxu0 0.0
    %1572 = vmatprep.subr.mxu0 0.0
    %1573 = vmatpush2.msra.mxu0 0.0
    %1574 = vmatprep.subr.mxu0 0.0
    %1575 = vmatpush2.msra.mxu0 0.0
    %1576 = vmatprep.mubr.f32.mxu0 0.0
    %1577 = vmatmul.mubr.f32.gmra.mxu0 %v1504
    %v1578 = vpop.f32.mrf.mxu0
    %v1579 = vadd.f32 %v1502, %v1578
    %v1580 = vpop.f32.mrf.mxu0
    %1581 = vmatprep.mubr.f32.mxu0 0.0
    %1582 = vmatmul.mubr.f32.gmra.mxu0 %v1507
    %v1583 = vpop.f32.mrf.mxu0
    %v1584 = vadd.f32 %v1502, %v1583
    %v1585 = vpop.f32.mrf.mxu0
    %1586 = vmatprep.mubr.f32.mxu0 0.0
    %1587 = vmatmul.mubr.f32.gmra.mxu0 %v1510
    %v1588 = vpop.f32.mrf.mxu0
    %v1589 = vadd.f32 %v1502, %v1588
    %v1590 = vpop.f32.mrf.mxu0
    %1591 = vdwg.mxu0
    %v1592 = vmul.f32 %v1579, 1.702
    %v1593 = vmul.f32 %v1584, 1.702
    %v1594 = vmul.f32 %v1589, 1.702
    %v1595 = vxor.u32 %v1592, 2147483648
    %v1596 = vxor.u32 %v1593, 2147483648
    %v1597 = vxor.u32 %v1594, 2147483648
    %v1598 = vmul.f32 %v1595, 1.442695
    %v1599 = vpow.pop %v1598
    %v1600 = vmul.f32 %v1596, 1.442695
    %v1601 = vpow.pop %v1600
    %v1602 = vmul.f32 %v1597, 1.442695
    %v1603 = vpow.pop %v1602
    %v1604 = vadd.f32 %v1599, 1.0
    %v1605 = vadd.f32 %v1601, 1.0
    %v1606 = vadd.f32 %v1603, 1.0
    %v1607 = vrcp.pop %v1604
    %v1608 = vmul.f32 1.0, %v1607
    %v1609 = vrcp.pop %v1605
    %v1610 = vmul.f32 1.0, %v1609
    %v1611 = vrcp.pop %v1606
    %v1612 = vmul.f32 1.0, %v1611
    %v1613 = vmul.f32 %v1579, %v1608
    %v1614 = vmul.f32 %v1584, %v1610
    %v1615 = vmul.f32 %v1589, %v1612
    %v1616 = vld [vmem:[%s6] sm:$0xff]
    %v1617 = vld [vmem:[%s6 + $0x8] sm:$0xff]
    %v1618 = vld [vmem:[%s6 + $0x10] sm:$0xff]
    %v1619 = vld [vmem:[%s6 + $0x18] sm:$0xff]
    %v1620 = vld [vmem:[%s6 + $0x20] sm:$0xff]
    %v1621 = vld [vmem:[%s6 + $0x28] sm:$0xff]
    %v1622 = vld [vmem:[%s6 + $0x30] sm:$0xff]
    %v1623 = vld [vmem:[%s6 + $0x38] sm:$0xff]
    %vm1624 = vcmask 523264
    %v1626 = vsel %vm1624, %v1613, 0
    %v1629 = vsel %vm1624, %v1614, 0
    %v1632 = vsel %vm1624, %v1615, 0
    %1634 = vmatprep.subr.mxu0 0.0
    %1635 = vmatpush1.msra.mxu0 0.0
    %1636 = vmatprep.subr.mxu0 0.0
    %1637 = vmatpush1.msra.mxu0 0.0
    %1638 = vmatprep.subr.mxu0 0.0
    %1639 = vmatpush1.msra.mxu0 0.0
    %1640 = vmatprep.subr.mxu0 0.0
    %1641 = vmatpush1.msra.mxu0 0.0
    %1642 = vmatprep.subr.mxu0 0.0
    %1643 = vmatpush1.msra.mxu0 0.0
    %1644 = vmatprep.subr.mxu0 0.0
    %1645 = vmatpush1.msra.mxu0 0.0
    %1646 = vmatprep.subr.mxu0 0.0
    %1647 = vmatpush1.msra.mxu0 0.0
    %1648 = vmatprep.subr.mxu0 0.0
    %1649 = vmatpush1.msra.mxu0 0.0
    %1650 = vmatprep.subr.mxu0 0.0
    %1651 = vmatpush1.msra.mxu0 %v1623
    %1652 = vmatprep.subr.mxu0 0.0
    %1653 = vmatpush1.msra.mxu0 %v1622
    %1654 = vmatprep.subr.mxu0 0.0
    %1655 = vmatpush1.msra.mxu0 %v1621
    %1656 = vmatprep.subr.mxu0 0.0
    %1657 = vmatpush1.msra.mxu0 %v1620
    %1658 = vmatprep.subr.mxu0 0.0
    %1659 = vmatpush1.msra.mxu0 %v1619
    %1660 = vmatprep.subr.mxu0 0.0
    %1661 = vmatpush1.msra.mxu0 %v1618
    %1662 = vmatprep.subr.mxu0 0.0
    %1663 = vmatpush1.msra.mxu0 %v1617
    %1664 = vmatprep.subr.mxu0 0.0
    %1665 = vmatpush1.msra.mxu0 %v1616
    %1666 = vmatprep.subr.mxu0 0.0
    %1667 = vmatpush2.msra.mxu0 0.0
    %1668 = vmatprep.subr.mxu0 0.0
    %1669 = vmatpush2.msra.mxu0 0.0
    %1670 = vmatprep.subr.mxu0 0.0
    %1671 = vmatpush2.msra.mxu0 0.0
    %1672 = vmatprep.subr.mxu0 0.0
    %1673 = vmatpush2.msra.mxu0 0.0
    %1674 = vmatprep.subr.mxu0 0.0
    %1675 = vmatpush2.msra.mxu0 0.0
    %1676 = vmatprep.subr.mxu0 0.0
    %1677 = vmatpush2.msra.mxu0 0.0
    %1678 = vmatprep.subr.mxu0 0.0
    %1679 = vmatpush2.msra.mxu0 0.0
    %1680 = vmatprep.subr.mxu0 0.0
    %1681 = vmatpush2.msra.mxu0 0.0
    %1682 = vmatprep.subr.mxu0 0.0
    %1683 = vmatpush2.msra.mxu0 0.0
    %1684 = vmatprep.subr.mxu0 0.0
    %1685 = vmatpush2.msra.mxu0 0.0
    %1686 = vmatprep.subr.mxu0 0.0
    %1687 = vmatpush2.msra.mxu0 0.0
    %1688 = vmatprep.subr.mxu0 0.0
    %1689 = vmatpush2.msra.mxu0 0.0
    %1690 = vmatprep.subr.mxu0 0.0
    %1691 = vmatpush2.msra.mxu0 0.0
    %1692 = vmatprep.subr.mxu0 0.0
    %1693 = vmatpush2.msra.mxu0 0.0
    %1694 = vmatprep.subr.mxu0 0.0
    %1695 = vmatpush2.msra.mxu0 0.0
    %1696 = vmatprep.subr.mxu0 0.0
    %1697 = vmatpush2.msra.mxu0 0.0
    %1698 = vmatprep.mubr.f32.mxu0 0.0
    %1699 = vmatmul.mubr.f32.gmra.mxu0 %v1626
    %v1700 = vpop.f32.mrf.mxu0
    %v1701 = vadd.f32 0.0, %v1700
    %v1702 = vpop.f32.mrf.mxu0
    %1703 = vmatprep.mubr.f32.mxu0 0.0
    %1704 = vmatmul.mubr.f32.gmra.mxu0 %v1629
    %v1705 = vpop.f32.mrf.mxu0
    %v1706 = vadd.f32 0.0, %v1705
    %v1707 = vpop.f32.mrf.mxu0
    %1708 = vmatprep.mubr.f32.mxu0 0.0
    %1709 = vmatmul.mubr.f32.gmra.mxu0 %v1632
    %v1710 = vpop.f32.mrf.mxu0
    %v1711 = vpop.f32.mrf.mxu0
    %1712 = vdwg.mxu0
    %v1713 = vadd.f32 %v1436, %v1701
    %v1714 = vadd.f32 %v1437, %v1706
    %v1715 = vld [vmem:[%s8 + $0x9] sm:$0x1]
    %v1716 = vlaneseq
    %v1717 = vshrl.u32 %v1716, 7
    %v1718 = vsub.s32 0, %v1717
    %v1719 = vrot.slane %v1715, %v1718
    %v1720 = vadd.f32 %v1713, %v1719
    %v1721 = vadd.f32 %v1714, %v1719
    %v1722 = vsel %vm137, %v1720, 0.0
    %v1723 = vsel %vm137, %v1721, 0.0
    %v1724 = vadd.f32 %v1722, %v1723
    %v1725 = vrot.slane %v1724, 4
    %v1726 = vadd.f32 %v1724, %v1725
    %v1727 = vrot.slane %v1726, 2
    %v1728 = vadd.f32 %v1726, %v1727
    %v1729 = vrot.slane %v1728, 1
    %v1730 = vadd.f32 %v1728, %v1729
    %v1731 = vmul.f32 %v1730, 0.0625
    %v1732 = vld [vmem:[%s7] sm:$0xff]
    %v1733 = vld [vmem:[%s7 + $0x8] sm:$0xff]
    %v1734 = vld [vmem:[%s7 + $0x10] sm:$0xff]
    %v1735 = vld [vmem:[%s7 + $0x18] sm:$0xff]
    %v1736 = vld [vmem:[%s8 + $0xa] sm:$0x1]
    %v1738 = vsel %vm137, %v1731, 0
    %1740 = vmatprep.subr.mxu0 0.0
    %1741 = vmatpush1.msra.mxu0 0.0
    %1742 = vmatprep.subr.mxu0 0.0
    %1743 = vmatpush1.msra.mxu0 0.0
    %1744 = vmatprep.subr.mxu0 0.0
    %1745 = vmatpush1.msra.mxu0 0.0
    %1746 = vmatprep.subr.mxu0 0.0
    %1747 = vmatpush1.msra.mxu0 0.0
    %1748 = vmatprep.subr.mxu0 0.0
    %1749 = vmatpush1.msra.mxu0 0.0
    %1750 = vmatprep.subr.mxu0 0.0
    %1751 = vmatpush1.msra.mxu0 0.0
    %1752 = vmatprep.subr.mxu0 0.0
    %1753 = vmatpush1.msra.mxu0 0.0
    %1754 = vmatprep.subr.mxu0 0.0
    %1755 = vmatpush1.msra.mxu0 0.0
    %1756 = vmatprep.subr.mxu0 0.0
    %1757 = vmatpush1.msra.mxu0 0.0
    %1758 = vmatprep.subr.mxu0 0.0
    %1759 = vmatpush1.msra.mxu0 0.0
    %1760 = vmatprep.subr.mxu0 0.0
    %1761 = vmatpush1.msra.mxu0 0.0
    %1762 = vmatprep.subr.mxu0 0.0
    %1763 = vmatpush1.msra.mxu0 0.0
    %1764 = vmatprep.subr.mxu0 0.0
    %1765 = vmatpush1.msra.mxu0 %v1735
    %1766 = vmatprep.subr.mxu0 0.0
    %1767 = vmatpush1.msra.mxu0 %v1734
    %1768 = vmatprep.subr.mxu0 0.0
    %1769 = vmatpush1.msra.mxu0 %v1733
    %1770 = vmatprep.subr.mxu0 0.0
    %1771 = vmatpush1.msra.mxu0 %v1732
    %1772 = vmatprep.subr.mxu0 0.0
    %1773 = vmatpush2.msra.mxu0 0.0
    %1774 = vmatprep.subr.mxu0 0.0
    %1775 = vmatpush2.msra.mxu0 0.0
    %1776 = vmatprep.subr.mxu0 0.0
    %1777 = vmatpush2.msra.mxu0 0.0
    %1778 = vmatprep.subr.mxu0 0.0
    %1779 = vmatpush2.msra.mxu0 0.0
    %1780 = vmatprep.subr.mxu0 0.0
    %1781 = vmatpush2.msra.mxu0 0.0
    %1782 = vmatprep.subr.mxu0 0.0
    %1783 = vmatpush2.msra.mxu0 0.0
    %1784 = vmatprep.subr.mxu0 0.0
    %1785 = vmatpush2.msra.mxu0 0.0
    %1786 = vmatprep.subr.mxu0 0.0
    %1787 = vmatpush2.msra.mxu0 0.0
    %1788 = vmatprep.subr.mxu0 0.0
    %1789 = vmatpush2.msra.mxu0 0.0
    %1790 = vmatprep.subr.mxu0 0.0
    %1791 = vmatpush2.msra.mxu0 0.0
    %1792 = vmatprep.subr.mxu0 0.0
    %1793 = vmatpush2.msra.mxu0 0.0
    %1794 = vmatprep.subr.mxu0 0.0
    %1795 = vmatpush2.msra.mxu0 0.0
    %1796 = vmatprep.subr.mxu0 0.0
    %1797 = vmatpush2.msra.mxu0 0.0
    %1798 = vmatprep.subr.mxu0 0.0
    %1799 = vmatpush2.msra.mxu0 0.0
    %1800 = vmatprep.subr.mxu0 0.0
    %1801 = vmatpush2.msra.mxu0 0.0
    %1802 = vmatprep.subr.mxu0 0.0
    %1803 = vmatpush2.msra.mxu0 0.0
    %1804 = vmatprep.mubr.f32.mxu0 0.0
    %1805 = vmatmul.mubr.f32.gmra.mxu0 %v1738
    %v1806 = vpop.f32.mrf.mxu0
    %v1807 = vadd.f32 %v1736, %v1806
    %v1808 = vpop.f32.mrf.mxu0
    %1809 = vdwg.mxu0
    %vm1810 = vcmask 57344
    %v1811 = vsel %vm1810, %v1807, -inf
    %1812 = vmax.xlane.f32.xlu0 %v1811
    %v1813 = vpop.xlane.xlu0 %1812
    %v1814 = vsub.f32 %v1807, %v1813
    %v1815 = vmul.f32 %v1814, 1.442695
    %v1816 = vpow.pop %v1815
    %v1817 = vsel %vm1810, %v1816, 0.0
    %1818 = vadd.xlane.f32.xlu0 %v1817
    %v1819 = vpop.xlane.xlu0 %1818
    %v1820 = vlog2.pop %v1819
    %v1821 = vmul.f32 %v1820, 0.6931472
    %v1822 = vadd.f32 %v1813, %v1821
    %v1823 = vld [vmem:[%s8 + $0xb] sm:$0x1]
    %v1824 = vmul.f32 %v1823, %v1807
    %v1825 = vsel %vm1810, %v1824, 0.0
    %1826 = vadd.xlane.f32.xlu0 %v1825
    %v1827 = vpop.xlane.xlu0 %1826
    %v1828 = vsub.f32 %v1822, %v1827
    %vm1829 = vcmask 0
    %1830 = vst.msk [vmem:[#allocation2] sm:$0x1] %vm1829, %v1828
    // Predicated region
    $region38: #{clip_clf_loss.1} parent=1 // pred_check
      _
    $region39: #{clip_clf_loss.1} parent=1 // pred_check_branch
      %1832 = sbr.rel (0) target = $region41
    $region40: #{clip_clf_loss.1} parent=1 // pred_region
      %s1834 = ssub.s32 16, 16
      %1835 = vsyncadd [#allocation3], %s1834
      %s1837 = sshll.u32 [#allocation2], 4
      %s1838 = int_to_ptr.vmem [resolvable:$true] %s1837
      %1840 = dma.vmem_to_hbm [thread:$0]  %s1838, 16, %s9, [#allocation3]
    $region41: #{clip_clf_loss.1} parent=1 // pred_fallthru
      _
    // Predicated region
    $region42: #{clip_clf_loss.1} parent=1 // pred_check
      _
    $region43: #{clip_clf_loss.1} parent=1 // pred_check_branch
      %1842 = sbr.rel (0) target = $region45
    $region44: #{clip_clf_loss.1} parent=1 // pred_region
      %1843 = dma.done [#allocation3], 16
    $region45: #{clip_clf_loss.1} parent=1 // pred_fallthru
      _
    %1844 = vsyncpa [#allocation3], 1

</llo_original>
